<compile_context>
chip_gen: v7x
topology: tpu7x:2x2x1
jax: 0.10.0
libtpu: 0.0.40
codegen_flags: <defaults>
</compile_context>

<pallas_src>
import jax
import jax.numpy as jnp
from jax.experimental import pallas as pl
from jax.experimental.pallas import tpu as pltpu


def _round_up(x, m):
    return ((x + m - 1) // m) * m


# ----------------------------- Pallas kernel ------------------------------- #
def decoder_kernel(ids_ref,        # (TB, 1)   int32   token ids
                   hid_ref,        # (TB, H)   cdtype  previous hidden state
                   enc_ref,        # (TB, L, Henc) cdtype encoder outputs
                   w1e_ref,        # (TB, L, H) cdtype  precomputed W1@enc + b1 + b2
                   w2_ref,         # (H, H)    cdtype  W2^T
                   vrow_ref,       # (1, H)    f32     attention V weights
                                   #   (bV dropped: bv is a scalar -> softmax shift-invariant)
                   embgru_ref,     # (Vp, 3H)  cdtype  fused emb_table @ Wih_emb^T (gates r|z|n)
                   wihc_ref,       # (Henc, 3H) cdtype Wih_ctx^T (gates r|z|n)
                   whh_ref,        # (H, 3H)   cdtype  Whh^T (gates r|z|n)
                   grub_ref,       # (2, 3H)   f32     [bih; bhh]
                   wf1_ref,        # (H, E)    cdtype
                   bf1_ref,        # (1, E)    f32
                   wf2_ref,        # (E, Vp)   cdtype  vocab lane-padded
                   bf2_ref,        # (1, Vp)   f32
                   out_ref,        # (TB, Vp)  f32     logits (padded vocab)
                   newhid_ref,     # (TB, H)   f32     new hidden state
                   aw_ref=None):   # (TB, L)   f32     attention weights (optional output)
    tile_b, H = hid_ref.shape
    vp = embgru_ref.shape[0]
    cdtype = hid_ref.dtype
    f32 = jnp.float32

    h_prev = hid_ref[...]                                              # (TB, H)

    # --- embedding -> GRU input-gate contribution: single one-hot MXU matmul ---
    ids = ids_ref[...]                                                 # (TB, 1) int32
    iota = jax.lax.broadcasted_iota(jnp.int32, (tile_b, vp), 1)
    onehot = (iota == ids).astype(cdtype)                              # (TB, Vp)
    emb_gates = jnp.dot(onehot, embgru_ref[...],
                        preferred_element_type=f32)                    # (TB, 3H)

    # --- attention (W1·enc + b1 + b2 precomputed outside the decode step) ---
    w2h = jnp.dot(h_prev, w2_ref[...], preferred_element_type=f32)     # (TB, H)
    score = jnp.tanh(w1e_ref[...].astype(f32) + w2h[:, None, :])       # (TB, L, H)
    att_logit = jnp.sum(score * vrow_ref[...][None, :, :], axis=-1)    # (TB, L)
    m = jnp.max(att_logit, axis=-1, keepdims=True)
    e = jnp.exp(att_logit - m)
    aw = e * pl.reciprocal(jnp.sum(e, axis=-1, keepdims=True), approx=True)  # softmax over L
    context = jnp.sum(aw[:, :, None] * enc_ref[...].astype(f32), axis=1)     # (TB, Henc)

    # --- single-step GRU, gates stacked along N (PyTorch order r|z|n) ---
    gi = (jnp.dot(context.astype(cdtype), wihc_ref[...], preferred_element_type=f32)
          + emb_gates + grub_ref[0:1, :])                              # (TB, 3H)
    gh = (jnp.dot(h_prev, whh_ref[...], preferred_element_type=f32)
          + grub_ref[1:2, :])                                          # (TB, 3H)
    r = jax.nn.sigmoid(gi[:, 0:H] + gh[:, 0:H])
    z = jax.nn.sigmoid(gi[:, H:2 * H] + gh[:, H:2 * H])
    n = jnp.tanh(gi[:, 2 * H:3 * H] + r * gh[:, 2 * H:3 * H])
    h_new = (1.0 - z) * n + z * h_prev.astype(f32)                     # (TB, H) f32

    # --- FC head: Linear -> LeakyReLU(0.01) -> Linear (vocab lane-padded) ---
    f1 = jnp.dot(h_new.astype(cdtype), wf1_ref[...],
                 preferred_element_type=f32) + bf1_ref[...]
    f1 = jnp.where(f1 > 0, f1, 0.01 * f1)
    logits = jnp.dot(f1.astype(cdtype), wf2_ref[...],
                     preferred_element_type=f32) + bf2_ref[...]

    out_ref[...] = logits
    newhid_ref[...] = h_new
    if aw_ref is not None:
        aw_ref[...] = aw


# ---------------------------- param preparation ----------------------------- #
def prepare_params(p, compute_dtype=jnp.bfloat16):
    """One-time repack: transposes, gate stacking, bias folding, vocab lane
    padding, and the fused embedding->GRU-input-gate table."""
    f32 = jnp.float32
    cd = compute_dtype
    Henc = p["w1"].shape[1]
    V, _ = p["emb"].shape
    Vp = _round_up(max(V, 128), 128)

    # GRU input is cat([context, emb], -1): first Henc wih columns pair with the
    # context vector, the remaining E columns with the embedding.
    wih = p["wih"].astype(f32)                      # (3H, Henc + E), rows gate-stacked r|z|n
    wih_ctx = wih[:, :Henc]
    wih_emb = wih[:, Henc:]
    # Fused table: row v = embedding[v] @ Wih_emb^T (gate-stacked r|z|n), vocab padded to Vp.
    emb_gru = jnp.pad(p["emb"].astype(f32) @ wih_emb.T, ((0, Vp - V), (0, 0)))

    wf2_t = jnp.pad(p["wf2"].T.astype(f32), ((0, 0), (0, Vp - V)))     # (E, Vp)
    bf2 = jnp.pad(p["bf2"].astype(f32), (0, Vp - V))[None, :]          # (1, Vp)

    return {
        # consumed by precompute_w1e (runs once per decode sequence; kept f32)
        "w1_t": p["w1"].T.astype(f32),                                 # (Henc, H)
        "b12": (p["b1"] + p["b2"]).astype(f32),                        # (H,)
        # kernel-resident weights
        "w2_t": p["w2"].T.astype(cd),                                  # (H, H)
        "v_row": p["v"].astype(f32),                                   # (1, H); bV dropped
        "emb_gru": emb_gru.astype(cd),                                 # (Vp, 3H)
        "wih_ctx_t": wih_ctx.T.astype(cd),                             # (Henc, 3H)
        "whh_t": p["whh"].T.astype(cd),                                # (H, 3H)
        "gru_b": jnp.stack([p["bih"], p["bhh"]], 0).astype(f32),       # (2, 3H)
        "wf1_t": p["wf1"].T.astype(cd),                                # (H, E)
        "bf1": p["bf1"].astype(f32)[None, :],                          # (1, E)
        "wf2_t": wf2_t.astype(cd),                                     # (E, Vp)
        "bf2": bf2,                                                    # (1, Vp)
    }


def precompute_w1e(enc_output, pp):
    """Classic Bahdanau hoist: W1 @ enc (+ b1 + b2) is constant across decode
    steps, so compute it once per sequence outside the per-step kernel."""
    w1e = jnp.einsum("ble,eh->blh", enc_output.astype(jnp.float32), pp["w1_t"]) + pp["b12"]
    return w1e.astype(pp["w2_t"].dtype)


# ------------------------------- wrapper ------------------------------------ #
def decoder_forward(x_ids, hidden, enc_output, pp, w1e=None,
                    output_dim=None, return_attention=True):
    """x_ids: (B,) int32, hidden: (1, B, H), enc_output: (B, L, Henc).

    `w1e` may be precomputed once per decode sequence with precompute_w1e();
    if None it is computed here.  `output_dim` / `return_attention` must be
    static under jit.
    """
    B = x_ids.shape[0]
    L, Henc = enc_output.shape[1], enc_output.shape[2]
    H = hidden.shape[-1]
    cd = pp["w2_t"].dtype
    Vp = pp["wf2_t"].shape[1]
    if output_dim is None:
        output_dim = Vp

    # num_layers == 1 for this module config, so hidden[0] == sum over layers
    # (the module sums layers for attention and uses layer 0 for the GRU step).
    h0 = hidden[0]

    if w1e is None:
        w1e = precompute_w1e(enc_output, pp)

    # Batch tiling: sublane-aligned; >=2 tiles when the batch allows so both
    # v7x TensorCores get work; 256-row tiles for large batches (v6e/v7x MXU).
    b_pad = _round_up(max(B, 8), 8)
    if b_pad <= 8:
        tile_b = b_pad
    elif b_pad >= 512:
        tile_b = 256
    else:
        tile_b = min(128, _round_up((b_pad + 1) // 2, 8))
    b_pad = _round_up(b_pad, tile_b)
    n_tiles = b_pad // tile_b
    pad = b_pad - B

    ids_p = jnp.pad(x_ids.astype(jnp.int32), (0, pad)).reshape(b_pad, 1)  # padded ids stay in [0, V)
    h0_p = jnp.pad(h0, ((0, pad), (0, 0))).astype(cd)
    enc_p = jnp.pad(enc_output, ((0, pad), (0, 0), (0, 0))).astype(cd)
    w1e_p = jnp.pad(w1e.astype(cd), ((0, pad), (0, 0), (0, 0)))

    def const(arr):                       # resident (whole-array) weight blocks
        return pl.BlockSpec(arr.shape, lambda t: (0, 0))

    in_specs = [
        pl.BlockSpec((tile_b, 1), lambda t: (t, 0)),            # token ids
        pl.BlockSpec((tile_b, H), lambda t: (t, 0)),            # hidden tile
        pl.BlockSpec((tile_b, L, Henc), lambda t: (t, 0, 0)),   # encoder tile
        pl.BlockSpec((tile_b, L, H), lambda t: (t, 0, 0)),      # hoisted W1·enc tile
        const(pp["w2_t"]), const(pp["v_row"]),
        const(pp["emb_gru"]), const(pp["wih_ctx_t"]), const(pp["whh_t"]), const(pp["gru_b"]),
        const(pp["wf1_t"]), const(pp["bf1"]), const(pp["wf2_t"]), const(pp["bf2"]),
    ]
    out_shape = [jax.ShapeDtypeStruct((b_pad, Vp), jnp.float32),
                 jax.ShapeDtypeStruct((b_pad, H), jnp.float32)]
    out_specs = [pl.BlockSpec((tile_b, Vp), lambda t: (t, 0)),   # lane-dense (padded) logits
                 pl.BlockSpec((tile_b, H), lambda t: (t, 0))]
    if return_attention:
        out_shape.append(jax.ShapeDtypeStruct((b_pad, L), jnp.float32))
        out_specs.append(pl.BlockSpec((tile_b, L), lambda t: (t, 0)))

    # Explicit VMEM budget: double-buffered resident weights + streamed tiles + headroom.
    item_cd = jnp.dtype(cd).itemsize
    weight_bytes = sum(int(pp[k].size) * jnp.dtype(pp[k].dtype).itemsize
                       for k in ("w2_t", "v_row", "emb_gru", "wih_ctx_t", "whh_t",
                                 "gru_b", "wf1_t", "bf1", "wf2_t", "bf2"))
    tile_bytes = tile_b * (4 + (H + L * Henc + L * H) * item_cd
                           + (Vp + H + (L if return_attention else 0)) * 4)
    vmem_limit = int(min(100 * 2 ** 20,
                         max(16 * 2 ** 20, 2 * (weight_bytes + tile_bytes) + 8 * 2 ** 20)))

    outs = pl.pallas_call(
        decoder_kernel,
        grid=(n_tiles,),
        in_specs=in_specs,
        out_specs=tuple(out_specs),
        out_shape=tuple(out_shape),
        compiler_params=pltpu.CompilerParams(
            dimension_semantics=("parallel",),
            vmem_limit_bytes=vmem_limit),
    )(ids_p, h0_p, enc_p, w1e_p, pp["w2_t"], pp["v_row"], pp["emb_gru"],
      pp["wih_ctx_t"], pp["whh_t"], pp["gru_b"], pp["wf1_t"], pp["bf1"],
      pp["wf2_t"], pp["bf2"])

    logits = outs[0][:B, :output_dim]
    h_new = outs[1][:B].reshape(1, B, H)
    if return_attention:
        return logits, h_new, outs[2][:B].reshape(B, L, 1)
    return logits, h_new, None


# --------------------------- pure-JAX reference ------------------------------ #
def decoder_reference(x_ids, hidden, enc_output, p):
    H = hidden.shape[-1]
    emb = p["emb"][x_ids]                                        # (B, E)
    h = jnp.sum(hidden, axis=0)                                  # (B, H)
    w1e = enc_output @ p["w1"].T + p["b1"]                       # (B, L, H)
    w2h = (h @ p["w2"].T + p["b2"])[:, None, :]                  # (B, 1, H)
    score = jnp.tanh(w1e + w2h)
    att_logit = score @ p["v"].T + p["bv"]                       # (B, L, 1)
    aw = jax.nn.softmax(att_logit, axis=1)
    ctx = jnp.sum(aw * enc_output, axis=1)                       # (B, Henc)
    attend = jnp.concatenate([ctx, emb], axis=-1)
    gi = attend @ p["wih"].T + p["bih"]
    gh = h @ p["whh"].T + p["bhh"]
    r = jax.nn.sigmoid(gi[:, :H] + gh[:, :H])
    z = jax.nn.sigmoid(gi[:, H:2 * H] + gh[:, H:2 * H])
    n = jnp.tanh(gi[:, 2 * H:] + r * gh[:, 2 * H:])
    hn = (1.0 - z) * n + z * h
    f1 = hn @ p["wf1"].T + p["bf1"]
    f1 = jnp.where(f1 > 0, f1, 0.01 * f1)
    logits = f1 @ p["wf2"].T + p["bf2"]
    return logits, hn.reshape(1, *hn.shape), aw


# --------------------------------- main -------------------------------------- #
if __name__ == "__main__":
    # Module config: output_dim (vocab) = 48, embed_dim = 32, hidden_dim = 32,
    # gru, 1 layer, attention on, enc_outstate_dim = hidden_dim.
    B, L = 2, 8
    VOCAB, E, H = 48, 32, 32
    HENC = H

    key = jax.random.PRNGKey(0)
    keys = jax.random.split(key, 20)
    s = 0.1
    params = {
        "emb": jax.random.normal(keys[0], (VOCAB, E), jnp.float32) * s,
        "w1": jax.random.normal(keys[1], (H, HENC), jnp.float32) * s,
        "b1": jax.random.normal(keys[2], (H,), jnp.float32) * s,
        "w2": jax.random.normal(keys[3], (H, H), jnp.float32) * s,
        "b2": jax.random.normal(keys[4], (H,), jnp.float32) * s,
        "v": jax.random.normal(keys[5], (1, H), jnp.float32) * s,
        "bv": jax.random.normal(keys[6], (1,), jnp.float32) * s,
        "wih": jax.random.normal(keys[7], (3 * H, HENC + E), jnp.float32) * s,
        "bih": jax.random.normal(keys[8], (3 * H,), jnp.float32) * s,
        "whh": jax.random.normal(keys[9], (3 * H, H), jnp.float32) * s,
        "bhh": jax.random.normal(keys[10], (3 * H,), jnp.float32) * s,
        "wf1": jax.random.normal(keys[11], (E, H), jnp.float32) * s,
        "bf1": jax.random.normal(keys[12], (E,), jnp.float32) * s,
        "wf2": jax.random.normal(keys[13], (VOCAB, E), jnp.float32) * s,
        "bf2": jax.random.normal(keys[14], (VOCAB,), jnp.float32) * s,
    }

    x_ids = jax.random.randint(keys[15], (B,), 0, VOCAB, dtype=jnp.int32)   # x: (B, 1) squeezed
    hidden = jax.random.normal(keys[16], (1, B, H), jnp.float32) * s
    enc_output = jax.random.normal(keys[17], (B, L, HENC), jnp.float32) * s

    ref_logits, ref_h, ref_aw = decoder_reference(x_ids, hidden, enc_output, params)

    fwd = jax.jit(decoder_forward, static_argnames=("output_dim", "return_attention"))

    # f32 path: tight correctness check against the pure-JAX reference.
    pp32 = prepare_params(params, compute_dtype=jnp.float32)
    w1e32 = precompute_w1e(enc_output, pp32)          # hoisted once per decode sequence
    logits, h_new, aw = fwd(x_ids, hidden, enc_output, pp32, w1e32, output_dim=VOCAB)
    jax.block_until_ready((logits, h_new, aw))
    assert logits.shape == (B, VOCAB) and h_new.shape == (1, B, H) and aw.shape == (B, L, 1)
    assert jnp.allclose(logits, ref_logits, atol=5e-3, rtol=5e-3)
    assert jnp.allclose(h_new, ref_h, atol=5e-3, rtol=5e-3)
    assert jnp.allclose(aw, ref_aw, atol=5e-3, rtol=5e-3)

    # f32 path without the attention-weight output (narrow aw store skipped entirely).
    lo2, hn2, aw2 = fwd(x_ids, hidden, enc_output, pp32, w1e32,
                        output_dim=VOCAB, return_attention=False)
    jax.block_until_ready((lo2, hn2))
    assert aw2 is None
    assert jnp.allclose(lo2, ref_logits, atol=5e-3, rtol=5e-3)

    # bf16 weights/activations (perf-representative path); looser tolerance.
    ppbf = prepare_params(params, compute_dtype=jnp.bfloat16)
    w1ebf = precompute_w1e(enc_output, ppbf)
    lob, hnb, awb = fwd(x_ids, hidden, enc_output, ppbf, w1ebf, output_dim=VOCAB)
    jax.block_until_ready((lob, hnb, awb))
    assert jnp.allclose(lob, ref_logits, atol=3e-2, rtol=3e-2)
    assert jnp.allclose(hnb, ref_h, atol=3e-2, rtol=3e-2)
    assert jnp.allclose(awb, ref_aw, atol=3e-2, rtol=3e-2)

    print("KERNEL_OK")
</pallas_src>

<mosaic_0001>
module attributes {stable_mosaic.version = 11 : i64} {
  func.func @decoder_kernel(%arg0: i32, %arg1: memref<8x1xi32, #tpu.memory_space<vmem>>, %arg2: memref<8x32xf32, #tpu.memory_space<vmem>>, %arg3: memref<8x8x32xf32, #tpu.memory_space<vmem>>, %arg4: memref<8x8x32xf32, #tpu.memory_space<vmem>>, %arg5: memref<32x32xf32, #tpu.memory_space<vmem>>, %arg6: memref<1x32xf32, #tpu.memory_space<vmem>>, %arg7: memref<128x96xf32, #tpu.memory_space<vmem>>, %arg8: memref<32x96xf32, #tpu.memory_space<vmem>>, %arg9: memref<32x96xf32, #tpu.memory_space<vmem>>, %arg10: memref<2x96xf32, #tpu.memory_space<vmem>>, %arg11: memref<32x32xf32, #tpu.memory_space<vmem>>, %arg12: memref<1x32xf32, #tpu.memory_space<vmem>>, %arg13: memref<32x128xf32, #tpu.memory_space<vmem>>, %arg14: memref<1x128xf32, #tpu.memory_space<vmem>>, %arg15: memref<8x128xf32, #tpu.memory_space<vmem>>, %arg16: memref<8x32xf32, #tpu.memory_space<vmem>>, %arg17: memref<8x8xf32, #tpu.memory_space<vmem>>) attributes {dimension_semantics = [#tpu.dimension_semantics<parallel>], iteration_bounds = array<i64: 1>, scalar_prefetch = 0 : i64, scratch_operands = 0 : i64, tpu.core_type = #tpu.core_type<tc>, window_params = [{transform_indices = @transform_0, window_bounds = array<i64: 8, 1>}, {transform_indices = @transform_1, window_bounds = array<i64: 8, 32>}, {transform_indices = @transform_2, window_bounds = array<i64: 8, 8, 32>}, {transform_indices = @transform_3, window_bounds = array<i64: 8, 8, 32>}, {pipeline_mode = #tpu.pipeline_mode<synchronous>, transform_indices = @transform_4, window_bounds = array<i64: 32, 32>}, {pipeline_mode = #tpu.pipeline_mode<synchronous>, transform_indices = @transform_5, window_bounds = array<i64: 1, 32>}, {pipeline_mode = #tpu.pipeline_mode<synchronous>, transform_indices = @transform_6, window_bounds = array<i64: 128, 96>}, {pipeline_mode = #tpu.pipeline_mode<synchronous>, transform_indices = @transform_7, window_bounds = array<i64: 32, 96>}, {pipeline_mode = #tpu.pipeline_mode<synchronous>, transform_indices = @transform_8, window_bounds = array<i64: 32, 96>}, {pipeline_mode = #tpu.pipeline_mode<synchronous>, transform_indices = @transform_9, window_bounds = array<i64: 2, 96>}, {pipeline_mode = #tpu.pipeline_mode<synchronous>, transform_indices = @transform_10, window_bounds = array<i64: 32, 32>}, {pipeline_mode = #tpu.pipeline_mode<synchronous>, transform_indices = @transform_11, window_bounds = array<i64: 1, 32>}, {pipeline_mode = #tpu.pipeline_mode<synchronous>, transform_indices = @transform_12, window_bounds = array<i64: 32, 128>}, {pipeline_mode = #tpu.pipeline_mode<synchronous>, transform_indices = @transform_13, window_bounds = array<i64: 1, 128>}, {transform_indices = @transform_14, window_bounds = array<i64: 8, 128>}, {transform_indices = @transform_15, window_bounds = array<i64: 8, 32>}, {transform_indices = @transform_16, window_bounds = array<i64: 8, 8>}]} {
    %c0 = arith.constant 0 : index
    %c0_0 = arith.constant 0 : index
    %0 = vector.load %arg2[%c0, %c0_0] : memref<8x32xf32, #tpu.memory_space<vmem>>, vector<8x32xf32>
    %c0_1 = arith.constant 0 : index
    %c0_2 = arith.constant 0 : index
    %1 = vector.load %arg1[%c0_1, %c0_2] : memref<8x1xi32, #tpu.memory_space<vmem>>, vector<8x1xi32>
    %2 = tpu.iota {dimensions = array<i32: 1>} : vector<8x128xi32>
    %3 = vector.broadcast %1 : vector<8x1xi32> to vector<8x128xi32>
    %4 = arith.cmpi eq, %2, %3 : vector<8x128xi32>
    %5 = arith.extui %4 : vector<8x128xi1> to vector<8x128xi32>
    %6 = arith.sitofp %5 : vector<8x128xi32> to vector<8x128xf32>
    %c0_3 = arith.constant 0 : index
    %c0_4 = arith.constant 0 : index
    %7 = vector.load %arg7[%c0_3, %c0_4] : memref<128x96xf32, #tpu.memory_space<vmem>>, vector<128x96xf32>
    %cst = arith.constant dense<0.000000e+00> : vector<8x96xf32>
    %8 = tpu.matmul %6, %7, %cst {dimension_numbers = #tpu.dot_dimension_numbers<[1], [0], [0], [1], [0, 0, 1, 1], [], []>} : vector<8x128xf32>, vector<128x96xf32>, vector<8x96xf32> -> vector<8x96xf32>
    %c0_5 = arith.constant 0 : index
    %c0_6 = arith.constant 0 : index
    %9 = vector.load %arg5[%c0_5, %c0_6] : memref<32x32xf32, #tpu.memory_space<vmem>>, vector<32x32xf32>
    %cst_7 = arith.constant dense<0.000000e+00> : vector<8x32xf32>
    %10 = tpu.matmul %0, %9, %cst_7 {dimension_numbers = #tpu.dot_dimension_numbers<[1], [0], [0], [1], [0, 0, 1, 1], [], []>} : vector<8x32xf32>, vector<32x32xf32>, vector<8x32xf32> -> vector<8x32xf32>
    %c0_8 = arith.constant 0 : index
    %c0_9 = arith.constant 0 : index
    %c0_10 = arith.constant 0 : index
    %11 = vector.load %arg4[%c0_8, %c0_9, %c0_10] : memref<8x8x32xf32, #tpu.memory_space<vmem>>, vector<8x8x32xf32>
    %12 = vector.shape_cast %10 : vector<8x32xf32> to vector<8x1x32xf32>
    %13 = vector.broadcast %12 : vector<8x1x32xf32> to vector<8x8x32xf32>
    %14 = arith.addf %11, %13 : vector<8x8x32xf32>
    %15 = math.tanh %14 : vector<8x8x32xf32>
    %c0_11 = arith.constant 0 : index
    %c0_12 = arith.constant 0 : index
    %16 = vector.load %arg6[%c0_11, %c0_12] : memref<1x32xf32, #tpu.memory_space<vmem>>, vector<1x32xf32>
    %17 = vector.shape_cast %16 : vector<1x32xf32> to vector<1x1x32xf32>
    %18 = vector.broadcast %17 : vector<1x1x32xf32> to vector<8x8x32xf32>
    %19 = arith.mulf %15, %18 : vector<8x8x32xf32>
    %cst_13 = arith.constant dense<0.000000e+00> : vector<8x8xf32>
    %20 = vector.multi_reduction <add>, %19, %cst_13 [2] : vector<8x8x32xf32> to vector<8x8xf32>
    %cst_14 = arith.constant dense<0xFF800000> : vector<8xf32>
    %21 = vector.multi_reduction <maximumf>, %20, %cst_14 [1] : vector<8x8xf32> to vector<8xf32>
    %22 = vector.shape_cast %21 : vector<8xf32> to vector<8x1xf32>
    %23 = vector.broadcast %22 : vector<8x1xf32> to vector<8x8xf32>
    %24 = arith.subf %20, %23 : vector<8x8xf32>
    %25 = math.exp %24 : vector<8x8xf32>
    %cst_15 = arith.constant dense<0.000000e+00> : vector<8xf32>
    %26 = vector.multi_reduction <add>, %25, %cst_15 [1] : vector<8x8xf32> to vector<8xf32>
    %27 = vector.shape_cast %26 : vector<8xf32> to vector<8x1xf32>
    %28 = tpu.reciprocal %27 {approx = true} : vector<8x1xf32> -> vector<8x1xf32>
    %29 = vector.broadcast %28 : vector<8x1xf32> to vector<8x8xf32>
    %30 = arith.mulf %25, %29 : vector<8x8xf32>
    %31 = vector.shape_cast %30 : vector<8x8xf32> to vector<8x8x1xf32>
    %c0_16 = arith.constant 0 : index
    %c0_17 = arith.constant 0 : index
    %c0_18 = arith.constant 0 : index
    %32 = vector.load %arg3[%c0_16, %c0_17, %c0_18] : memref<8x8x32xf32, #tpu.memory_space<vmem>>, vector<8x8x32xf32>
    %33 = vector.broadcast %31 : vector<8x8x1xf32> to vector<8x8x32xf32>
    %34 = arith.mulf %33, %32 : vector<8x8x32xf32>
    %cst_19 = arith.constant dense<0.000000e+00> : vector<8x32xf32>
    %35 = vector.multi_reduction <add>, %34, %cst_19 [1] : vector<8x8x32xf32> to vector<8x32xf32>
    %c0_20 = arith.constant 0 : index
    %c0_21 = arith.constant 0 : index
    %36 = vector.load %arg8[%c0_20, %c0_21] : memref<32x96xf32, #tpu.memory_space<vmem>>, vector<32x96xf32>
    %cst_22 = arith.constant dense<0.000000e+00> : vector<8x96xf32>
    %37 = tpu.matmul %35, %36, %cst_22 {dimension_numbers = #tpu.dot_dimension_numbers<[1], [0], [0], [1], [0, 0, 1, 1], [], []>} : vector<8x32xf32>, vector<32x96xf32>, vector<8x96xf32> -> vector<8x96xf32>
    %38 = arith.addf %37, %8 : vector<8x96xf32>
    %c0_23 = arith.constant 0 : index
    %c0_24 = arith.constant 0 : index
    %39 = vector.load %arg10[%c0_23, %c0_24] : memref<2x96xf32, #tpu.memory_space<vmem>>, vector<1x96xf32>
    %40 = vector.broadcast %39 : vector<1x96xf32> to vector<8x96xf32>
    %41 = arith.addf %38, %40 : vector<8x96xf32>
    %c0_25 = arith.constant 0 : index
    %c0_26 = arith.constant 0 : index
    %42 = vector.load %arg9[%c0_25, %c0_26] : memref<32x96xf32, #tpu.memory_space<vmem>>, vector<32x96xf32>
    %cst_27 = arith.constant dense<0.000000e+00> : vector<8x96xf32>
    %43 = tpu.matmul %0, %42, %cst_27 {dimension_numbers = #tpu.dot_dimension_numbers<[1], [0], [0], [1], [0, 0, 1, 1], [], []>} : vector<8x32xf32>, vector<32x96xf32>, vector<8x96xf32> -> vector<8x96xf32>
    %c1 = arith.constant 1 : index
    %c0_28 = arith.constant 0 : index
    %44 = vector.load %arg10[%c1, %c0_28] : memref<2x96xf32, #tpu.memory_space<vmem>>, vector<1x96xf32>
    %45 = vector.broadcast %44 : vector<1x96xf32> to vector<8x96xf32>
    %46 = arith.addf %43, %45 : vector<8x96xf32>
    %47 = vector.extract_strided_slice %41 {offsets = [0, 0], sizes = [8, 32], strides = [1, 1]} : vector<8x96xf32> to vector<8x32xf32>
    %48 = vector.extract_strided_slice %46 {offsets = [0, 0], sizes = [8, 32], strides = [1, 1]} : vector<8x96xf32> to vector<8x32xf32>
    %49 = arith.addf %47, %48 : vector<8x32xf32>
    %50 = arith.negf %49 : vector<8x32xf32>
    %51 = math.exp %50 : vector<8x32xf32>
    %cst_29 = arith.constant 1.000000e+00 : f32
    %52 = vector.broadcast %cst_29 : f32 to vector<8x32xf32>
    %53 = arith.addf %52, %51 : vector<8x32xf32>
    %54 = arith.divf %52, %53 : vector<8x32xf32>
    %55 = vector.extract_strided_slice %41 {offsets = [0, 32], sizes = [8, 32], strides = [1, 1]} : vector<8x96xf32> to vector<8x32xf32>
    %56 = vector.extract_strided_slice %46 {offsets = [0, 32], sizes = [8, 32], strides = [1, 1]} : vector<8x96xf32> to vector<8x32xf32>
    %57 = arith.addf %55, %56 : vector<8x32xf32>
    %58 = arith.negf %57 : vector<8x32xf32>
    %59 = math.exp %58 : vector<8x32xf32>
    %cst_30 = arith.constant 1.000000e+00 : f32
    %60 = vector.broadcast %cst_30 : f32 to vector<8x32xf32>
    %61 = arith.addf %60, %59 : vector<8x32xf32>
    %62 = arith.divf %60, %61 : vector<8x32xf32>
    %63 = vector.extract_strided_slice %41 {offsets = [0, 64], sizes = [8, 32], strides = [1, 1]} : vector<8x96xf32> to vector<8x32xf32>
    %64 = vector.extract_strided_slice %46 {offsets = [0, 64], sizes = [8, 32], strides = [1, 1]} : vector<8x96xf32> to vector<8x32xf32>
    %65 = arith.mulf %54, %64 : vector<8x32xf32>
    %66 = arith.addf %63, %65 : vector<8x32xf32>
    %67 = math.tanh %66 : vector<8x32xf32>
    %cst_31 = arith.constant 1.000000e+00 : f32
    %68 = vector.broadcast %cst_31 : f32 to vector<8x32xf32>
    %69 = arith.subf %68, %62 : vector<8x32xf32>
    %70 = arith.mulf %69, %67 : vector<8x32xf32>
    %71 = arith.mulf %62, %0 : vector<8x32xf32>
    %72 = arith.addf %70, %71 : vector<8x32xf32>
    %c0_32 = arith.constant 0 : index
    %c0_33 = arith.constant 0 : index
    %73 = vector.load %arg11[%c0_32, %c0_33] : memref<32x32xf32, #tpu.memory_space<vmem>>, vector<32x32xf32>
    %cst_34 = arith.constant dense<0.000000e+00> : vector<8x32xf32>
    %74 = tpu.matmul %72, %73, %cst_34 {dimension_numbers = #tpu.dot_dimension_numbers<[1], [0], [0], [1], [0, 0, 1, 1], [], []>} : vector<8x32xf32>, vector<32x32xf32>, vector<8x32xf32> -> vector<8x32xf32>
    %c0_35 = arith.constant 0 : index
    %c0_36 = arith.constant 0 : index
    %75 = vector.load %arg12[%c0_35, %c0_36] : memref<1x32xf32, #tpu.memory_space<vmem>>, vector<1x32xf32>
    %76 = vector.broadcast %75 : vector<1x32xf32> to vector<8x32xf32>
    %77 = arith.addf %74, %76 : vector<8x32xf32>
    %cst_37 = arith.constant 0.000000e+00 : f32
    %78 = vector.broadcast %cst_37 : f32 to vector<8x32xf32>
    %79 = arith.cmpf ogt, %77, %78 : vector<8x32xf32>
    %cst_38 = arith.constant 0.00999999977 : f32
    %80 = vector.broadcast %cst_38 : f32 to vector<8x32xf32>
    %81 = arith.mulf %80, %77 : vector<8x32xf32>
    %82 = arith.select %79, %77, %81 : vector<8x32xi1>, vector<8x32xf32>
    %c0_39 = arith.constant 0 : index
    %c0_40 = arith.constant 0 : index
    %83 = vector.load %arg13[%c0_39, %c0_40] : memref<32x128xf32, #tpu.memory_space<vmem>>, vector<32x128xf32>
    %cst_41 = arith.constant dense<0.000000e+00> : vector<8x128xf32>
    %84 = tpu.matmul %82, %83, %cst_41 {dimension_numbers = #tpu.dot_dimension_numbers<[1], [0], [0], [1], [0, 0, 1, 1], [], []>} : vector<8x32xf32>, vector<32x128xf32>, vector<8x128xf32> -> vector<8x128xf32>
    %c0_42 = arith.constant 0 : index
    %c0_43 = arith.constant 0 : index
    %85 = vector.load %arg14[%c0_42, %c0_43] : memref<1x128xf32, #tpu.memory_space<vmem>>, vector<1x128xf32>
    %86 = vector.broadcast %85 : vector<1x128xf32> to vector<8x128xf32>
    %87 = arith.addf %84, %86 : vector<8x128xf32>
    %c0_44 = arith.constant 0 : index
    %c0_45 = arith.constant 0 : index
    %88 = vector.load %arg15[%c0_44, %c0_45] : memref<8x128xf32, #tpu.memory_space<vmem>>, vector<8x128xf32>
    tpu.vector_store %arg15[%c0_44, %c0_45], %87 {strides = array<i32>} : memref<8x128xf32, #tpu.memory_space<vmem>>, vector<8x128xf32>,
    %c0_46 = arith.constant 0 : index
    %c0_47 = arith.constant 0 : index
    %89 = vector.load %arg16[%c0_46, %c0_47] : memref<8x32xf32, #tpu.memory_space<vmem>>, vector<8x32xf32>
    tpu.vector_store %arg16[%c0_46, %c0_47], %72 {strides = array<i32>} : memref<8x32xf32, #tpu.memory_space<vmem>>, vector<8x32xf32>,
    %c0_48 = arith.constant 0 : index
    %c0_49 = arith.constant 0 : index
    %90 = vector.load %arg17[%c0_48, %c0_49] : memref<8x8xf32, #tpu.memory_space<vmem>>, vector<8x8xf32>
    tpu.vector_store %arg17[%c0_48, %c0_49], %30 {strides = array<i32>} : memref<8x8xf32, #tpu.memory_space<vmem>>, vector<8x8xf32>,
    return
  }
  func.func @transform_0(%arg0: i32) -> (i32, i32) {
    %c0_i32 = arith.constant 0 : i32
    %c0_i32_0 = arith.constant 0 : i32
    return %arg0, %c0_i32 : i32, i32
  }
  func.func @transform_1(%arg0: i32) -> (i32, i32) {
    %c0_i32 = arith.constant 0 : i32
    %c0_i32_0 = arith.constant 0 : i32
    return %arg0, %c0_i32 : i32, i32
  }
  func.func @transform_2(%arg0: i32) -> (i32, i32, i32) {
    %c0_i32 = arith.constant 0 : i32
    %c0_i32_0 = arith.constant 0 : i32
    %c0_i32_1 = arith.constant 0 : i32
    return %arg0, %c0_i32, %c0_i32_0 : i32, i32, i32
  }
  func.func @transform_3(%arg0: i32) -> (i32, i32, i32) {
    %c0_i32 = arith.constant 0 : i32
    %c0_i32_0 = arith.constant 0 : i32
    %c0_i32_1 = arith.constant 0 : i32
    return %arg0, %c0_i32, %c0_i32_0 : i32, i32, i32
  }
  func.func @transform_4(%arg0: i32) -> (i32, i32) {
    %c0_i32 = arith.constant 0 : i32
    %c0_i32_0 = arith.constant 0 : i32
    %c0_i32_1 = arith.constant 0 : i32
    return %c0_i32, %c0_i32_0 : i32, i32
  }
  func.func @transform_5(%arg0: i32) -> (i32, i32) {
    %c0_i32 = arith.constant 0 : i32
    %c0_i32_0 = arith.constant 0 : i32
    %c0_i32_1 = arith.constant 0 : i32
    return %c0_i32, %c0_i32_0 : i32, i32
  }
  func.func @transform_6(%arg0: i32) -> (i32, i32) {
    %c0_i32 = arith.constant 0 : i32
    %c0_i32_0 = arith.constant 0 : i32
    %c0_i32_1 = arith.constant 0 : i32
    return %c0_i32, %c0_i32_0 : i32, i32
  }
  func.func @transform_7(%arg0: i32) -> (i32, i32) {
    %c0_i32 = arith.constant 0 : i32
    %c0_i32_0 = arith.constant 0 : i32
    %c0_i32_1 = arith.constant 0 : i32
    return %c0_i32, %c0_i32_0 : i32, i32
  }
  func.func @transform_8(%arg0: i32) -> (i32, i32) {
    %c0_i32 = arith.constant 0 : i32
    %c0_i32_0 = arith.constant 0 : i32
    %c0_i32_1 = arith.constant 0 : i32
    return %c0_i32, %c0_i32_0 : i32, i32
  }
  func.func @transform_9(%arg0: i32) -> (i32, i32) {
    %c0_i32 = arith.constant 0 : i32
    %c0_i32_0 = arith.constant 0 : i32
    %c0_i32_1 = arith.constant 0 : i32
    return %c0_i32, %c0_i32_0 : i32, i32
  }
  func.func @transform_10(%arg0: i32) -> (i32, i32) {
    %c0_i32 = arith.constant 0 : i32
    %c0_i32_0 = arith.constant 0 : i32
    %c0_i32_1 = arith.constant 0 : i32
    return %c0_i32, %c0_i32_0 : i32, i32
  }
  func.func @transform_11(%arg0: i32) -> (i32, i32) {
    %c0_i32 = arith.constant 0 : i32
    %c0_i32_0 = arith.constant 0 : i32
    %c0_i32_1 = arith.constant 0 : i32
    return %c0_i32, %c0_i32_0 : i32, i32
  }
  func.func @transform_12(%arg0: i32) -> (i32, i32) {
    %c0_i32 = arith.constant 0 : i32
    %c0_i32_0 = arith.constant 0 : i32
    %c0_i32_1 = arith.constant 0 : i32
    return %c0_i32, %c0_i32_0 : i32, i32
  }
  func.func @transform_13(%arg0: i32) -> (i32, i32) {
    %c0_i32 = arith.constant 0 : i32
    %c0_i32_0 = arith.constant 0 : i32
    %c0_i32_1 = arith.constant 0 : i32
    return %c0_i32, %c0_i32_0 : i32, i32
  }
  func.func @transform_14(%arg0: i32) -> (i32, i32) {
    %c0_i32 = arith.constant 0 : i32
    %c0_i32_0 = arith.constant 0 : i32
    return %arg0, %c0_i32 : i32, i32
  }
  func.func @transform_15(%arg0: i32) -> (i32, i32) {
    %c0_i32 = arith.constant 0 : i32
    %c0_i32_0 = arith.constant 0 : i32
    return %arg0, %c0_i32 : i32, i32
  }
  func.func @transform_16(%arg0: i32) -> (i32, i32) {
    %c0_i32 = arith.constant 0 : i32
    %c0_i32_0 = arith.constant 0 : i32
    return %arg0, %c0_i32 : i32, i32
  }
}

</mosaic_0001>

<llo_original>
// kernel: decoder_forward.1
$region0: #{decoder_forward.1}
  #allocation0 [shape = 'u32[]', space=smem, size = 0x4, offset = 0x4, fixed_abs, tag = 'smem constant byte address 0x4 - core index']
  #allocation1 [shape = 'u32[144,128]{1,0:T(1,128)}', space=vmem, size = 0x12000, scoped, tag = 'internal scratch']
  %s0 = inlined_call_operand.vmem [shape: s32[8,1], index: 0, kind: input, shape index: {}]
  %s1 = inlined_call_operand.vmem [shape: f32[8,32], index: 1, kind: input, shape index: {}]
  %s2 = inlined_call_operand.vmem [shape: f32[8,8,32], index: 2, kind: input, shape index: {}]
  %s3 = inlined_call_operand.vmem [shape: f32[8,8,32], index: 3, kind: input, shape index: {}]
  %s4 = inlined_call_operand.vmem [shape: f32[32,32], index: 4, kind: input, shape index: {}]
  %s5 = inlined_call_operand.vmem [shape: f32[1,32], index: 5, kind: input, shape index: {}]
  %s6 = inlined_call_operand.vmem [shape: f32[128,96], index: 6, kind: input, shape index: {}]
  %s7 = inlined_call_operand.vmem [shape: f32[32,96], index: 7, kind: input, shape index: {}]
  %s8 = inlined_call_operand.vmem [shape: f32[32,96], index: 8, kind: input, shape index: {}]
  %s9 = inlined_call_operand.vmem [shape: f32[2,96], index: 9, kind: input, shape index: {}]
  %s10 = inlined_call_operand.vmem [shape: f32[32,32], index: 10, kind: input, shape index: {}]
  %s11 = inlined_call_operand.vmem [shape: f32[1,32], index: 11, kind: input, shape index: {}]
  %s12 = inlined_call_operand.vmem [shape: f32[32,128], index: 12, kind: input, shape index: {}]
  %s13 = inlined_call_operand.vmem [shape: f32[1,128], index: 13, kind: input, shape index: {}]
  %s14 = inlined_call_operand.vmem [shape: f32[8,128], index: 14, kind: output, shape index: {0}]
  %s15 = inlined_call_operand.vmem [shape: f32[8,32], index: 15, kind: output, shape index: {1}]
  %s16 = inlined_call_operand.vmem [shape: f32[8,8], index: 16, kind: output, shape index: {2}]
  %17 = xla_tuple %s14, %s15, %s16
  %s18 = sld [smem:[#allocation0]]
  $region82: #{decoder_forward.1} parent=0
    _
  %s20 = ssub.s32 1, %s18
  %s21 = scalar_select 0, %s20, %s18
  // Predicated region
  $region2: #{decoder_forward.1} parent=0 // pred_check
    _
  $region3: #{decoder_forward.1} parent=0 // pred_check_branch
    %23 = sbr.rel (0) target = $region5
  $region4: #{decoder_forward.1} parent=0 // pred_region
    _
  $region5: #{decoder_forward.1} parent=0 // pred_fallthru
    _
  // Predicated region
  $region6: #{decoder_forward.1} parent=0 // pred_check
    _
  $region7: #{decoder_forward.1} parent=0 // pred_check_branch
    %25 = sbr.rel (0) target = $region9
  $region8: #{decoder_forward.1} parent=0 // pred_region
    _
  $region9: #{decoder_forward.1} parent=0 // pred_fallthru
    _
  // Predicated region
  $region10: #{decoder_forward.1} parent=0 // pred_check
    _
  $region11: #{decoder_forward.1} parent=0 // pred_check_branch
    %27 = sbr.rel (0) target = $region13
  $region12: #{decoder_forward.1} parent=0 // pred_region
    _
  $region13: #{decoder_forward.1} parent=0 // pred_fallthru
    _
  // Predicated region
  $region14: #{decoder_forward.1} parent=0 // pred_check
    _
  $region15: #{decoder_forward.1} parent=0 // pred_check_branch
    %29 = sbr.rel (0) target = $region17
  $region16: #{decoder_forward.1} parent=0 // pred_region
    _
  $region17: #{decoder_forward.1} parent=0 // pred_fallthru
    _
  // Predicated region
  $region18: #{decoder_forward.1} parent=0 // pred_check
    _
  $region19: #{decoder_forward.1} parent=0 // pred_check_branch
    %31 = sbr.rel (0) target = $region21
  $region20: #{decoder_forward.1} parent=0 // pred_region
    _
  $region21: #{decoder_forward.1} parent=0 // pred_fallthru
    _
  // Predicated region
  $region22: #{decoder_forward.1} parent=0 // pred_check
    _
  $region23: #{decoder_forward.1} parent=0 // pred_check_branch
    %33 = sbr.rel (0) target = $region25
  $region24: #{decoder_forward.1} parent=0 // pred_region
    _
  $region25: #{decoder_forward.1} parent=0 // pred_fallthru
    _
  // Predicated region
  $region26: #{decoder_forward.1} parent=0 // pred_check
    _
  $region27: #{decoder_forward.1} parent=0 // pred_check_branch
    %35 = sbr.rel (0) target = $region29
  $region28: #{decoder_forward.1} parent=0 // pred_region
    _
  $region29: #{decoder_forward.1} parent=0 // pred_fallthru
    _
  // Predicated region
  $region30: #{decoder_forward.1} parent=0 // pred_check
    _
  $region31: #{decoder_forward.1} parent=0 // pred_check_branch
    %37 = sbr.rel (0) target = $region33
  $region32: #{decoder_forward.1} parent=0 // pred_region
    _
  $region33: #{decoder_forward.1} parent=0 // pred_fallthru
    _
  // Predicated region
  $region34: #{decoder_forward.1} parent=0 // pred_check
    _
  $region35: #{decoder_forward.1} parent=0 // pred_check_branch
    %39 = sbr.rel (0) target = $region37
  $region36: #{decoder_forward.1} parent=0 // pred_region
    _
  $region37: #{decoder_forward.1} parent=0 // pred_fallthru
    _
  // Predicated region
  $region38: #{decoder_forward.1} parent=0 // pred_check
    _
  $region39: #{decoder_forward.1} parent=0 // pred_check_branch
    %41 = sbr.rel (0) target = $region41
  $region40: #{decoder_forward.1} parent=0 // pred_region
    _
  $region41: #{decoder_forward.1} parent=0 // pred_fallthru
    _
  // Predicated region
  $region42: #{decoder_forward.1} parent=0 // pred_check
    _
  $region43: #{decoder_forward.1} parent=0 // pred_check_branch
    %43 = sbr.rel (0) target = $region45
  $region44: #{decoder_forward.1} parent=0 // pred_region
    _
  $region45: #{decoder_forward.1} parent=0 // pred_fallthru
    _
  // Predicated region
  $region46: #{decoder_forward.1} parent=0 // pred_check
    _
  $region47: #{decoder_forward.1} parent=0 // pred_check_branch
    %45 = sbr.rel (0) target = $region49
  $region48: #{decoder_forward.1} parent=0 // pred_region
    _
  $region49: #{decoder_forward.1} parent=0 // pred_fallthru
    _
  // Predicated region
  $region50: #{decoder_forward.1} parent=0 // pred_check
    _
  $region51: #{decoder_forward.1} parent=0 // pred_check_branch
    %47 = sbr.rel (0) target = $region53
  $region52: #{decoder_forward.1} parent=0 // pred_region
    _
  $region53: #{decoder_forward.1} parent=0 // pred_fallthru
    _
  // Predicated region
  $region54: #{decoder_forward.1} parent=0 // pred_check
    _
  $region55: #{decoder_forward.1} parent=0 // pred_check_branch
    %49 = sbr.rel (0) target = $region57
  $region56: #{decoder_forward.1} parent=0 // pred_region
    _
  $region57: #{decoder_forward.1} parent=0 // pred_fallthru
    _
  %v50 = vld [vmem:[%s1] sm:$0xff]
  %v51 = vld [vmem:[%s0] sm:$0xff]
  %v52 = vlaneseq
  %v53 = vand.u32 %v52, 127
  %54 = vset.pattern.permute.xlu0 0
  %55 = vperm.xlu0 %54, %v51
  %v56 = vpop.permute.xlu0 %55
  %vm57 = vcmp.eq.s32.totalorder %v53, %v56
  %v58 = vsel %vm57, 1, 0
  %v59 = vcvt.s32.f32 %v58
  %v60 = vld [vmem:[%s6] sm:$0xff]
  %v61 = vld [vmem:[%s6 + $0x8] sm:$0xff]
  %v62 = vld [vmem:[%s6 + $0x10] sm:$0xff]
  %v63 = vld [vmem:[%s6 + $0x18] sm:$0xff]
  %v64 = vld [vmem:[%s6 + $0x20] sm:$0xff]
  %v65 = vld [vmem:[%s6 + $0x28] sm:$0xff]
  %v66 = vld [vmem:[%s6 + $0x30] sm:$0xff]
  %v67 = vld [vmem:[%s6 + $0x38] sm:$0xff]
  %v68 = vld [vmem:[%s6 + $0x40] sm:$0xff]
  %v69 = vld [vmem:[%s6 + $0x48] sm:$0xff]
  %v70 = vld [vmem:[%s6 + $0x50] sm:$0xff]
  %v71 = vld [vmem:[%s6 + $0x58] sm:$0xff]
  %v72 = vld [vmem:[%s6 + $0x60] sm:$0xff]
  %v73 = vld [vmem:[%s6 + $0x68] sm:$0xff]
  %v74 = vld [vmem:[%s6 + $0x70] sm:$0xff]
  %v75 = vld [vmem:[%s6 + $0x78] sm:$0xff]
  %76 = vmatprep.subr.mxu0 0.0
  %77 = vmatpush1.msra.mxu0 %v60
  %78 = vmatprep.subr.mxu0 0.0
  %79 = vmatpush1.msra.mxu0 %v61
  %80 = vmatprep.subr.mxu0 0.0
  %81 = vmatpush1.msra.mxu0 %v62
  %82 = vmatprep.subr.mxu0 0.0
  %83 = vmatpush1.msra.mxu0 %v63
  %84 = vmatprep.subr.mxu0 0.0
  %85 = vmatpush1.msra.mxu0 %v64
  %86 = vmatprep.subr.mxu0 0.0
  %87 = vmatpush1.msra.mxu0 %v65
  %88 = vmatprep.subr.mxu0 0.0
  %89 = vmatpush1.msra.mxu0 %v66
  %90 = vmatprep.subr.mxu0 0.0
  %91 = vmatpush1.msra.mxu0 %v67
  %92 = vmatprep.subr.mxu0 0.0
  %93 = vmatpush1.msra.mxu0 %v68
  %94 = vmatprep.subr.mxu0 0.0
  %95 = vmatpush1.msra.mxu0 %v69
  %96 = vmatprep.subr.mxu0 0.0
  %97 = vmatpush1.msra.mxu0 %v70
  %98 = vmatprep.subr.mxu0 0.0
  %99 = vmatpush1.msra.mxu0 %v71
  %100 = vmatprep.subr.mxu0 0.0
  %101 = vmatpush1.msra.mxu0 %v72
  %102 = vmatprep.subr.mxu0 0.0
  %103 = vmatpush1.msra.mxu0 %v73
  %104 = vmatprep.subr.mxu0 0.0
  %105 = vmatpush1.msra.mxu0 %v74
  %106 = vmatprep.subr.mxu0 0.0
  %107 = vmatpush1.msra.mxu0 %v75
  %108 = vmatprep.subr.mxu0 0.0
  %109 = vmatpush1.msra.mxu0 0.0
  %110 = vmatprep.subr.mxu0 0.0
  %111 = vmatpush1.msra.mxu0 0.0
  %112 = vmatprep.subr.mxu0 0.0
  %113 = vmatpush1.msra.mxu0 0.0
  %114 = vmatprep.subr.mxu0 0.0
  %115 = vmatpush1.msra.mxu0 0.0
  %116 = vmatprep.subr.mxu0 0.0
  %117 = vmatpush1.msra.mxu0 0.0
  %118 = vmatprep.subr.mxu0 0.0
  %119 = vmatpush1.msra.mxu0 0.0
  %120 = vmatprep.subr.mxu0 0.0
  %121 = vmatpush1.msra.mxu0 0.0
  %122 = vmatprep.subr.mxu0 0.0
  %123 = vmatpush1.msra.mxu0 0.0
  %124 = vmatprep.subr.mxu0 0.0
  %125 = vmatpush1.msra.mxu0 0.0
  %126 = vmatprep.subr.mxu0 0.0
  %127 = vmatpush1.msra.mxu0 0.0
  %128 = vmatprep.subr.mxu0 0.0
  %129 = vmatpush1.msra.mxu0 0.0
  %130 = vmatprep.subr.mxu0 0.0
  %131 = vmatpush1.msra.mxu0 0.0
  %132 = vmatprep.subr.mxu0 0.0
  %133 = vmatpush1.msra.mxu0 0.0
  %134 = vmatprep.subr.mxu0 0.0
  %135 = vmatpush1.msra.mxu0 0.0
  %136 = vmatprep.subr.mxu0 0.0
  %137 = vmatpush1.msra.mxu0 0.0
  %138 = vmatprep.subr.mxu0 0.0
  %139 = vmatpush1.msra.mxu0 0.0
  %140 = vmatprep.mubr.f32.mxu0 0.0
  %141 = vmatmul.mubr.f32.gmra.mrb[0].mxu0 %v59
  %v142 = vpop.f32.mrb[0].mxu0
  %v143 = vadd.f32 0.0, %v142
  %v144 = vpop.f32.mrb[0].mxu0
  %145 = vdwg.mxu0
  %v146 = vld [vmem:[%s4] sm:$0xff]
  %v147 = vld [vmem:[%s4 + $0x8] sm:$0xff]
  %v148 = vld [vmem:[%s4 + $0x10] sm:$0xff]
  %v149 = vld [vmem:[%s4 + $0x18] sm:$0xff]
  %vm150 = vcmask 261120
  %v152 = vsel %vm150, %v50, 0
  %154 = vmatprep.subr.mxu0 0.0
  %155 = vmatpush1.msra.mxu0 %v146
  %156 = vmatprep.subr.mxu0 0.0
  %157 = vmatpush1.msra.mxu0 %v147
  %158 = vmatprep.subr.mxu0 0.0
  %159 = vmatpush1.msra.mxu0 %v148
  %160 = vmatprep.subr.mxu0 0.0
  %161 = vmatpush1.msra.mxu0 %v149
  %162 = vmatprep.subr.mxu0 0.0
  %163 = vmatpush1.msra.mxu0 0.0
  %164 = vmatprep.subr.mxu0 0.0
  %165 = vmatpush1.msra.mxu0 0.0
  %166 = vmatprep.subr.mxu0 0.0
  %167 = vmatpush1.msra.mxu0 0.0
  %168 = vmatprep.subr.mxu0 0.0
  %169 = vmatpush1.msra.mxu0 0.0
  %170 = vmatprep.subr.mxu0 0.0
  %171 = vmatpush1.msra.mxu0 0.0
  %172 = vmatprep.subr.mxu0 0.0
  %173 = vmatpush1.msra.mxu0 0.0
  %174 = vmatprep.subr.mxu0 0.0
  %175 = vmatpush1.msra.mxu0 0.0
  %176 = vmatprep.subr.mxu0 0.0
  %177 = vmatpush1.msra.mxu0 0.0
  %178 = vmatprep.subr.mxu0 0.0
  %179 = vmatpush1.msra.mxu0 0.0
  %180 = vmatprep.subr.mxu0 0.0
  %181 = vmatpush1.msra.mxu0 0.0
  %182 = vmatprep.subr.mxu0 0.0
  %183 = vmatpush1.msra.mxu0 0.0
  %184 = vmatprep.subr.mxu0 0.0
  %185 = vmatpush1.msra.mxu0 0.0
  %186 = vmatprep.subr.mxu0 0.0
  %187 = vmatpush1.msra.mxu0 0.0
  %188 = vmatprep.subr.mxu0 0.0
  %189 = vmatpush1.msra.mxu0 0.0
  %190 = vmatprep.subr.mxu0 0.0
  %191 = vmatpush1.msra.mxu0 0.0
  %192 = vmatprep.subr.mxu0 0.0
  %193 = vmatpush1.msra.mxu0 0.0
  %194 = vmatprep.subr.mxu0 0.0
  %195 = vmatpush1.msra.mxu0 0.0
  %196 = vmatprep.subr.mxu0 0.0
  %197 = vmatpush1.msra.mxu0 0.0
  %198 = vmatprep.subr.mxu0 0.0
  %199 = vmatpush1.msra.mxu0 0.0
  %200 = vmatprep.subr.mxu0 0.0
  %201 = vmatpush1.msra.mxu0 0.0
  %202 = vmatprep.subr.mxu0 0.0
  %203 = vmatpush1.msra.mxu0 0.0
  %204 = vmatprep.subr.mxu0 0.0
  %205 = vmatpush1.msra.mxu0 0.0
  %206 = vmatprep.subr.mxu0 0.0
  %207 = vmatpush1.msra.mxu0 0.0
  %208 = vmatprep.subr.mxu0 0.0
  %209 = vmatpush1.msra.mxu0 0.0
  %210 = vmatprep.subr.mxu0 0.0
  %211 = vmatpush1.msra.mxu0 0.0
  %212 = vmatprep.subr.mxu0 0.0
  %213 = vmatpush1.msra.mxu0 0.0
  %214 = vmatprep.subr.mxu0 0.0
  %215 = vmatpush1.msra.mxu0 0.0
  %216 = vmatprep.subr.mxu0 0.0
  %217 = vmatpush1.msra.mxu0 0.0
  %218 = vmatprep.mubr.f32.mxu0 0.0
  %219 = vmatmul.mubr.f32.gmra.mrb[0].mxu0 %v152
  %v220 = vpop.f32.mrb[0].mxu0
  %v221 = vadd.f32 0.0, %v220
  %v222 = vpop.f32.mrb[0].mxu0
  %223 = vdwg.mxu0
  %v224 = vld [vmem:[%s3] sm:$0xff]
  %v225 = vld [vmem:[%s3 + $0x8] sm:$0xff]
  %v226 = vld [vmem:[%s3 + $0x10] sm:$0xff]
  %v227 = vld [vmem:[%s3 + $0x18] sm:$0xff]
  %v228 = vld [vmem:[%s3 + $0x20] sm:$0xff]
  %v229 = vld [vmem:[%s3 + $0x28] sm:$0xff]
  %v230 = vld [vmem:[%s3 + $0x30] sm:$0xff]
  %v231 = vld [vmem:[%s3 + $0x38] sm:$0xff]
  %v233 = vcombine.high %v221, %v221
  %v235 = vunpack.c.l.s4 1966171168
  %v236 = vunpack.c.0.s8 %v235
  %v237 = vlaneseq
  %v238 = vshrl.u32 %v237, 7
  %v239 = vsub.s32 %v236, %v238
  %v240 = vrot.slane %v221, %v239
  %v242 = vunpack.c.l.s4 1966171168
  %v243 = vunpack.c.0.s8 %v242
  %v244 = vlaneseq
  %v245 = vshrl.u32 %v244, 7
  %v246 = vsub.s32 %v243, %v245
  %v247 = vrot.slane %v233, %v246
  %v248 = vcombine.high %v240, %v240
  %v249 = vcombine.high %v247, %v247
  %v251 = vunpack.c.l.s4 1966171168
  %v252 = vunpack.c.0.s8 %v251
  %v253 = vlaneseq
  %v254 = vshrl.u32 %v253, 7
  %v255 = vsub.s32 %v252, %v254
  %v256 = vrot.slane %v240, %v255
  %v258 = vunpack.c.l.s4 1966171168
  %v259 = vunpack.c.0.s8 %v258
  %v260 = vlaneseq
  %v261 = vshrl.u32 %v260, 7
  %v262 = vsub.s32 %v259, %v261
  %v263 = vrot.slane %v247, %v262
  %v265 = vunpack.c.l.s4 1966171168
  %v266 = vunpack.c.0.s8 %v265
  %v267 = vlaneseq
  %v268 = vshrl.u32 %v267, 7
  %v269 = vsub.s32 %v266, %v268
  %v270 = vrot.slane %v248, %v269
  %v272 = vunpack.c.l.s4 1966171168
  %v273 = vunpack.c.0.s8 %v272
  %v274 = vlaneseq
  %v275 = vshrl.u32 %v274, 7
  %v276 = vsub.s32 %v273, %v275
  %v277 = vrot.slane %v249, %v276
  %v278 = vcombine.high %v256, %v256
  %v279 = vcombine.high %v263, %v263
  %v280 = vcombine.high %v270, %v270
  %v281 = vcombine.high %v277, %v277
  %v282 = vlaneseq
  %v283 = vshrl.u32 %v282, 7
  %v284 = vsub.s32 0, %v283
  %v285 = vrot.slane %v256, %v284
  %v286 = vlaneseq
  %v287 = vshrl.u32 %v286, 7
  %v288 = vsub.s32 0, %v287
  %v289 = vrot.slane %v270, %v288
  %v290 = vlaneseq
  %v291 = vshrl.u32 %v290, 7
  %v292 = vsub.s32 0, %v291
  %v293 = vrot.slane %v278, %v292
  %v294 = vlaneseq
  %v295 = vshrl.u32 %v294, 7
  %v296 = vsub.s32 0, %v295
  %v297 = vrot.slane %v280, %v296
  %v298 = vlaneseq
  %v299 = vshrl.u32 %v298, 7
  %v300 = vsub.s32 0, %v299
  %v301 = vrot.slane %v263, %v300
  %v302 = vlaneseq
  %v303 = vshrl.u32 %v302, 7
  %v304 = vsub.s32 0, %v303
  %v305 = vrot.slane %v277, %v304
  %v306 = vlaneseq
  %v307 = vshrl.u32 %v306, 7
  %v308 = vsub.s32 0, %v307
  %v309 = vrot.slane %v279, %v308
  %v310 = vlaneseq
  %v311 = vshrl.u32 %v310, 7
  %v312 = vsub.s32 0, %v311
  %v313 = vrot.slane %v281, %v312
  %v322 = vadd.f32 %v224, %v285
  %v323 = vadd.f32 %v225, %v289
  %v324 = vadd.f32 %v226, %v293
  %v325 = vadd.f32 %v227, %v297
  %v326 = vadd.f32 %v228, %v301
  %v327 = vadd.f32 %v229, %v305
  %v328 = vadd.f32 %v230, %v309
  %v329 = vadd.f32 %v231, %v313
  %v330 = vtanh.pop %v322
  %v331 = vtanh.pop %v323
  %v332 = vtanh.pop %v324
  %v333 = vtanh.pop %v325
  %v334 = vtanh.pop %v326
  %v335 = vtanh.pop %v327
  %v336 = vtanh.pop %v328
  %v337 = vtanh.pop %v329
  %v338 = vld [vmem:[%s5] sm:$0x1]
  %v340 = vlaneseq
  %v341 = vshrl.u32 %v340, 7
  %v342 = vsub.s32 0, %v341
  %v343 = vrot.slane %v338, %v342
  %v345 = vmul.f32 %v330, %v343
  %v346 = vmul.f32 %v331, %v343
  %v347 = vmul.f32 %v332, %v343
  %v348 = vmul.f32 %v333, %v343
  %v349 = vmul.f32 %v334, %v343
  %v350 = vmul.f32 %v335, %v343
  %v351 = vmul.f32 %v336, %v343
  %v352 = vmul.f32 %v337, %v343
  %v353 = vsel %vm150, %v345, 0.0
  %354 = vadd.xlane.f32.xlu0 %v353
  %v355 = vpop.xlane.xlu0 %354
  %v356 = vsel %vm150, %v346, 0.0
  %357 = vadd.xlane.f32.xlu0 %v356
  %v358 = vpop.xlane.xlu0 %357
  %v359 = vsel %vm150, %v347, 0.0
  %360 = vadd.xlane.f32.xlu0 %v359
  %v361 = vpop.xlane.xlu0 %360
  %v362 = vsel %vm150, %v348, 0.0
  %363 = vadd.xlane.f32.xlu0 %v362
  %v364 = vpop.xlane.xlu0 %363
  %v365 = vsel %vm150, %v349, 0.0
  %366 = vadd.xlane.f32.xlu0 %v365
  %v367 = vpop.xlane.xlu0 %366
  %v368 = vsel %vm150, %v350, 0.0
  %369 = vadd.xlane.f32.xlu0 %v368
  %v370 = vpop.xlane.xlu0 %369
  %v371 = vsel %vm150, %v351, 0.0
  %372 = vadd.xlane.f32.xlu0 %v371
  %v373 = vpop.xlane.xlu0 %372
  %v374 = vsel %vm150, %v352, 0.0
  %375 = vadd.xlane.f32.xlu0 %v374
  %v376 = vpop.xlane.xlu0 %375
  %v385 = vlaneseq
  %v386 = vshrl.u32 %v385, 7
  %v387 = vsub.s32 %v53, %v386
  %v388 = vrot.slane %v355, %v387
  %v389 = vlaneseq
  %v390 = vshrl.u32 %v389, 7
  %v391 = vsub.s32 %v53, %v390
  %v392 = vrot.slane %v358, %v391
  %v393 = vlaneseq
  %v394 = vshrl.u32 %v393, 7
  %v395 = vsub.s32 %v53, %v394
  %v396 = vrot.slane %v361, %v395
  %v397 = vlaneseq
  %v398 = vshrl.u32 %v397, 7
  %v399 = vsub.s32 %v53, %v398
  %v400 = vrot.slane %v364, %v399
  %v401 = vlaneseq
  %v402 = vshrl.u32 %v401, 7
  %v403 = vsub.s32 %v53, %v402
  %v404 = vrot.slane %v367, %v403
  %v405 = vlaneseq
  %v406 = vshrl.u32 %v405, 7
  %v407 = vsub.s32 %v53, %v406
  %v408 = vrot.slane %v370, %v407
  %v409 = vlaneseq
  %v410 = vshrl.u32 %v409, 7
  %v411 = vsub.s32 %v53, %v410
  %v412 = vrot.slane %v373, %v411
  %v413 = vlaneseq
  %v414 = vshrl.u32 %v413, 7
  %v415 = vsub.s32 %v53, %v414
  %v416 = vrot.slane %v376, %v415
  %vm417 = vcmask 1041409
  %v418 = vsel %vm417, %v392, %v388
  %vm419 = vcmask 1042434
  %v420 = vsel %vm419, %v396, %v418
  %vm421 = vcmask 1043459
  %v422 = vsel %vm421, %v400, %v420
  %vm423 = vcmask 1044484
  %v424 = vsel %vm423, %v404, %v422
  %vm425 = vcmask 1045509
  %v426 = vsel %vm425, %v408, %v424
  %vm427 = vcmask 1046534
  %v428 = vsel %vm427, %v412, %v426
  %vm429 = vcmask 1047559
  %v430 = vsel %vm429, %v416, %v428
  %vm432 = vcmask 64512
  %v433 = vsel %vm432, %v430, -inf
  %434 = vmax.xlane.f32.xlu0 %v433
  %v435 = vpop.xlane.xlu0 %434
  %v437 = vlaneseq
  %v438 = vshrl.u32 %v437, 7
  %v439 = vsub.s32 0, %v438
  %v440 = vrot.slane %v435, %v439
  %v441 = vlaneseq
  %v442 = vshrl.u32 %v441, 7
  %v443 = vsub.s32 1, %v442
  %v444 = vrot.slane %v435, %v443
  %v445 = vlaneseq
  %v446 = vshrl.u32 %v445, 7
  %v447 = vsub.s32 2, %v446
  %v448 = vrot.slane %v435, %v447
  %v449 = vlaneseq
  %v450 = vshrl.u32 %v449, 7
  %v451 = vsub.s32 3, %v450
  %v452 = vrot.slane %v435, %v451
  %v453 = vlaneseq
  %v454 = vshrl.u32 %v453, 7
  %v455 = vsub.s32 4, %v454
  %v456 = vrot.slane %v435, %v455
  %v457 = vlaneseq
  %v458 = vshrl.u32 %v457, 7
  %v459 = vsub.s32 5, %v458
  %v460 = vrot.slane %v435, %v459
  %v461 = vlaneseq
  %v462 = vshrl.u32 %v461, 7
  %v463 = vsub.s32 6, %v462
  %v464 = vrot.slane %v435, %v463
  %v465 = vlaneseq
  %v466 = vshrl.u32 %v465, 7
  %v467 = vsub.s32 7, %v466
  %v468 = vrot.slane %v435, %v467
  %v477 = vsub.f32 %v355, %v440
  %v478 = vsub.f32 %v358, %v444
  %v479 = vsub.f32 %v361, %v448
  %v480 = vsub.f32 %v364, %v452
  %v481 = vsub.f32 %v367, %v456
  %v482 = vsub.f32 %v370, %v460
  %v483 = vsub.f32 %v373, %v464
  %v484 = vsub.f32 %v376, %v468
  %v485 = vmul.f32 %v477, 1.442695
  %v486 = vpow.pop %v485
  %v487 = vmul.f32 %v478, 1.442695
  %v488 = vpow.pop %v487
  %v489 = vmul.f32 %v479, 1.442695
  %v490 = vpow.pop %v489
  %v491 = vmul.f32 %v480, 1.442695
  %v492 = vpow.pop %v491
  %v493 = vmul.f32 %v481, 1.442695
  %v494 = vpow.pop %v493
  %v495 = vmul.f32 %v482, 1.442695
  %v496 = vpow.pop %v495
  %v497 = vmul.f32 %v483, 1.442695
  %v498 = vpow.pop %v497
  %v499 = vmul.f32 %v484, 1.442695
  %v500 = vpow.pop %v499
  %509 = vset.pattern.permute.xlu0 0
  %510 = vperm.xlu0 %509, %v486
  %v511 = vpop.permute.xlu0 %510
  %512 = vset.pattern.permute.xlu0 0
  %513 = vperm.xlu0 %512, %v488
  %v514 = vpop.permute.xlu0 %513
  %515 = vset.pattern.permute.xlu0 0
  %516 = vperm.xlu0 %515, %v490
  %v517 = vpop.permute.xlu0 %516
  %518 = vset.pattern.permute.xlu0 0
  %519 = vperm.xlu0 %518, %v492
  %v520 = vpop.permute.xlu0 %519
  %521 = vset.pattern.permute.xlu0 0
  %522 = vperm.xlu0 %521, %v494
  %v523 = vpop.permute.xlu0 %522
  %524 = vset.pattern.permute.xlu0 0
  %525 = vperm.xlu0 %524, %v496
  %v526 = vpop.permute.xlu0 %525
  %527 = vset.pattern.permute.xlu0 0
  %528 = vperm.xlu0 %527, %v498
  %v529 = vpop.permute.xlu0 %528
  %530 = vset.pattern.permute.xlu0 0
  %531 = vperm.xlu0 %530, %v500
  %v532 = vpop.permute.xlu0 %531
  %v533 = vlaneseq
  %v534 = vshrl.u32 %v533, 7
  %v535 = vsub.s32 %v53, %v534
  %v536 = vrot.slane %v511, %v535
  %v537 = vlaneseq
  %v538 = vshrl.u32 %v537, 7
  %v539 = vsub.s32 %v53, %v538
  %v540 = vrot.slane %v514, %v539
  %v541 = vlaneseq
  %v542 = vshrl.u32 %v541, 7
  %v543 = vsub.s32 %v53, %v542
  %v544 = vrot.slane %v517, %v543
  %v545 = vlaneseq
  %v546 = vshrl.u32 %v545, 7
  %v547 = vsub.s32 %v53, %v546
  %v548 = vrot.slane %v520, %v547
  %v549 = vlaneseq
  %v550 = vshrl.u32 %v549, 7
  %v551 = vsub.s32 %v53, %v550
  %v552 = vrot.slane %v523, %v551
  %v553 = vlaneseq
  %v554 = vshrl.u32 %v553, 7
  %v555 = vsub.s32 %v53, %v554
  %v556 = vrot.slane %v526, %v555
  %v557 = vlaneseq
  %v558 = vshrl.u32 %v557, 7
  %v559 = vsub.s32 %v53, %v558
  %v560 = vrot.slane %v529, %v559
  %v561 = vlaneseq
  %v562 = vshrl.u32 %v561, 7
  %v563 = vsub.s32 %v53, %v562
  %v564 = vrot.slane %v532, %v563
  %v565 = vsel %vm417, %v540, %v536
  %v566 = vsel %vm419, %v544, %v565
  %v567 = vsel %vm421, %v548, %v566
  %v568 = vsel %vm423, %v552, %v567
  %v569 = vsel %vm425, %v556, %v568
  %v570 = vsel %vm427, %v560, %v569
  %v571 = vsel %vm429, %v564, %v570
  %v573 = vsel %vm432, %v571, 0.0
  %574 = vadd.xlane.f32.xlu0 %v573
  %v575 = vpop.xlane.xlu0 %574
  %v576 = vrcp.pop %v575
  %v578 = vlaneseq
  %v579 = vshrl.u32 %v578, 7
  %v580 = vsub.s32 0, %v579
  %v581 = vrot.slane %v576, %v580
  %v582 = vlaneseq
  %v583 = vshrl.u32 %v582, 7
  %v584 = vsub.s32 1, %v583
  %v585 = vrot.slane %v576, %v584
  %v586 = vlaneseq
  %v587 = vshrl.u32 %v586, 7
  %v588 = vsub.s32 2, %v587
  %v589 = vrot.slane %v576, %v588
  %v590 = vlaneseq
  %v591 = vshrl.u32 %v590, 7
  %v592 = vsub.s32 3, %v591
  %v593 = vrot.slane %v576, %v592
  %v594 = vlaneseq
  %v595 = vshrl.u32 %v594, 7
  %v596 = vsub.s32 4, %v595
  %v597 = vrot.slane %v576, %v596
  %v598 = vlaneseq
  %v599 = vshrl.u32 %v598, 7
  %v600 = vsub.s32 5, %v599
  %v601 = vrot.slane %v576, %v600
  %v602 = vlaneseq
  %v603 = vshrl.u32 %v602, 7
  %v604 = vsub.s32 6, %v603
  %v605 = vrot.slane %v576, %v604
  %v606 = vlaneseq
  %v607 = vshrl.u32 %v606, 7
  %v608 = vsub.s32 7, %v607
  %v609 = vrot.slane %v576, %v608
  %v618 = vmul.f32 %v486, %v581
  %v619 = vmul.f32 %v488, %v585
  %v620 = vmul.f32 %v490, %v589
  %v621 = vmul.f32 %v492, %v593
  %v622 = vmul.f32 %v494, %v597
  %v623 = vmul.f32 %v496, %v601
  %v624 = vmul.f32 %v498, %v605
  %v625 = vmul.f32 %v500, %v609
  %v626 = vld [vmem:[%s2] sm:$0xff]
  %v627 = vld [vmem:[%s2 + $0x8] sm:$0xff]
  %v628 = vld [vmem:[%s2 + $0x10] sm:$0xff]
  %v629 = vld [vmem:[%s2 + $0x18] sm:$0xff]
  %v630 = vld [vmem:[%s2 + $0x20] sm:$0xff]
  %v631 = vld [vmem:[%s2 + $0x28] sm:$0xff]
  %v632 = vld [vmem:[%s2 + $0x30] sm:$0xff]
  %v633 = vld [vmem:[%s2 + $0x38] sm:$0xff]
  %635 = vset.pattern.permute.xlu0 0
  %636 = vperm.xlu0 %635, %v618
  %v637 = vpop.permute.xlu0 %636
  %640 = vset.pattern.permute.xlu0 0
  %641 = vperm.xlu0 %640, %v619
  %v642 = vpop.permute.xlu0 %641
  %645 = vset.pattern.permute.xlu0 0
  %646 = vperm.xlu0 %645, %v620
  %v647 = vpop.permute.xlu0 %646
  %650 = vset.pattern.permute.xlu0 0
  %651 = vperm.xlu0 %650, %v621
  %v652 = vpop.permute.xlu0 %651
  %655 = vset.pattern.permute.xlu0 0
  %656 = vperm.xlu0 %655, %v622
  %v657 = vpop.permute.xlu0 %656
  %660 = vset.pattern.permute.xlu0 0
  %661 = vperm.xlu0 %660, %v623
  %v662 = vpop.permute.xlu0 %661
  %665 = vset.pattern.permute.xlu0 0
  %666 = vperm.xlu0 %665, %v624
  %v667 = vpop.permute.xlu0 %666
  %670 = vset.pattern.permute.xlu0 0
  %671 = vperm.xlu0 %670, %v625
  %v672 = vpop.permute.xlu0 %671
  %v674 = vmul.f32 %v637, %v626
  %v675 = vmul.f32 %v642, %v627
  %v676 = vmul.f32 %v647, %v628
  %v677 = vmul.f32 %v652, %v629
  %v678 = vmul.f32 %v657, %v630
  %v679 = vmul.f32 %v662, %v631
  %v680 = vmul.f32 %v667, %v632
  %v681 = vmul.f32 %v672, %v633
  %v682 = vsel %vm150, %v674, 0.0
  %v683 = vrot.slane %v682, 4
  %v684 = vadd.f32 %v682, %v683
  %v685 = vrot.slane %v684, 2
  %v686 = vadd.f32 %v684, %v685
  %v687 = vrot.slane %v686, 1
  %v688 = vadd.f32 %v686, %v687
  %v689 = vsel %vm150, %v675, 0.0
  %v690 = vrot.slane %v689, 4
  %v691 = vadd.f32 %v689, %v690
  %v692 = vrot.slane %v691, 2
  %v693 = vadd.f32 %v691, %v692
  %v694 = vrot.slane %v693, 1
  %v695 = vadd.f32 %v693, %v694
  %v696 = vsel %vm150, %v676, 0.0
  %v697 = vrot.slane %v696, 4
  %v698 = vadd.f32 %v696, %v697
  %v699 = vrot.slane %v698, 2
  %v700 = vadd.f32 %v698, %v699
  %v701 = vrot.slane %v700, 1
  %v702 = vadd.f32 %v700, %v701
  %v703 = vsel %vm150, %v677, 0.0
  %v704 = vrot.slane %v703, 4
  %v705 = vadd.f32 %v703, %v704
  %v706 = vrot.slane %v705, 2
  %v707 = vadd.f32 %v705, %v706
  %v708 = vrot.slane %v707, 1
  %v709 = vadd.f32 %v707, %v708
  %v710 = vsel %vm150, %v678, 0.0
  %v711 = vrot.slane %v710, 4
  %v712 = vadd.f32 %v710, %v711
  %v713 = vrot.slane %v712, 2
  %v714 = vadd.f32 %v712, %v713
  %v715 = vrot.slane %v714, 1
  %v716 = vadd.f32 %v714, %v715
  %v717 = vsel %vm150, %v679, 0.0
  %v718 = vrot.slane %v717, 4
  %v719 = vadd.f32 %v717, %v718
  %v720 = vrot.slane %v719, 2
  %v721 = vadd.f32 %v719, %v720
  %v722 = vrot.slane %v721, 1
  %v723 = vadd.f32 %v721, %v722
  %v724 = vsel %vm150, %v680, 0.0
  %v725 = vrot.slane %v724, 4
  %v726 = vadd.f32 %v724, %v725
  %v727 = vrot.slane %v726, 2
  %v728 = vadd.f32 %v726, %v727
  %v729 = vrot.slane %v728, 1
  %v730 = vadd.f32 %v728, %v729
  %v731 = vsel %vm150, %v681, 0.0
  %v732 = vrot.slane %v731, 4
  %v733 = vadd.f32 %v731, %v732
  %v734 = vrot.slane %v733, 2
  %v735 = vadd.f32 %v733, %v734
  %v736 = vrot.slane %v735, 1
  %v737 = vadd.f32 %v735, %v736
  %v738 = vld [vmem:[%s7] sm:$0xff]
  %v739 = vld [vmem:[%s7 + $0x8] sm:$0xff]
  %v740 = vld [vmem:[%s7 + $0x10] sm:$0xff]
  %v741 = vld [vmem:[%s7 + $0x18] sm:$0xff]
  %v750 = vsel %vm417, %v695, %v688
  %v751 = vsel %vm419, %v702, %v750
  %v752 = vsel %vm421, %v709, %v751
  %v753 = vsel %vm423, %v716, %v752
  %v754 = vsel %vm425, %v723, %v753
  %v755 = vsel %vm427, %v730, %v754
  %v756 = vsel %vm429, %v737, %v755
  %v757 = vsel %vm150, %v756, 0
  %759 = vmatprep.subr.mxu0 0.0
  %760 = vmatpush1.msra.mxu0 %v738
  %761 = vmatprep.subr.mxu0 0.0
  %762 = vmatpush1.msra.mxu0 %v739
  %763 = vmatprep.subr.mxu0 0.0
  %764 = vmatpush1.msra.mxu0 %v740
  %765 = vmatprep.subr.mxu0 0.0
  %766 = vmatpush1.msra.mxu0 %v741
  %767 = vmatprep.subr.mxu0 0.0
  %768 = vmatpush1.msra.mxu0 0.0
  %769 = vmatprep.subr.mxu0 0.0
  %770 = vmatpush1.msra.mxu0 0.0
  %771 = vmatprep.subr.mxu0 0.0
  %772 = vmatpush1.msra.mxu0 0.0
  %773 = vmatprep.subr.mxu0 0.0
  %774 = vmatpush1.msra.mxu0 0.0
  %775 = vmatprep.subr.mxu0 0.0
  %776 = vmatpush1.msra.mxu0 0.0
  %777 = vmatprep.subr.mxu0 0.0
  %778 = vmatpush1.msra.mxu0 0.0
  %779 = vmatprep.subr.mxu0 0.0
  %780 = vmatpush1.msra.mxu0 0.0
  %781 = vmatprep.subr.mxu0 0.0
  %782 = vmatpush1.msra.mxu0 0.0
  %783 = vmatprep.subr.mxu0 0.0
  %784 = vmatpush1.msra.mxu0 0.0
  %785 = vmatprep.subr.mxu0 0.0
  %786 = vmatpush1.msra.mxu0 0.0
  %787 = vmatprep.subr.mxu0 0.0
  %788 = vmatpush1.msra.mxu0 0.0
  %789 = vmatprep.subr.mxu0 0.0
  %790 = vmatpush1.msra.mxu0 0.0
  %791 = vmatprep.subr.mxu0 0.0
  %792 = vmatpush1.msra.mxu0 0.0
  %793 = vmatprep.subr.mxu0 0.0
  %794 = vmatpush1.msra.mxu0 0.0
  %795 = vmatprep.subr.mxu0 0.0
  %796 = vmatpush1.msra.mxu0 0.0
  %797 = vmatprep.subr.mxu0 0.0
  %798 = vmatpush1.msra.mxu0 0.0
  %799 = vmatprep.subr.mxu0 0.0
  %800 = vmatpush1.msra.mxu0 0.0
  %801 = vmatprep.subr.mxu0 0.0
  %802 = vmatpush1.msra.mxu0 0.0
  %803 = vmatprep.subr.mxu0 0.0
  %804 = vmatpush1.msra.mxu0 0.0
  %805 = vmatprep.subr.mxu0 0.0
  %806 = vmatpush1.msra.mxu0 0.0
  %807 = vmatprep.subr.mxu0 0.0
  %808 = vmatpush1.msra.mxu0 0.0
  %809 = vmatprep.subr.mxu0 0.0
  %810 = vmatpush1.msra.mxu0 0.0
  %811 = vmatprep.subr.mxu0 0.0
  %812 = vmatpush1.msra.mxu0 0.0
  %813 = vmatprep.subr.mxu0 0.0
  %814 = vmatpush1.msra.mxu0 0.0
  %815 = vmatprep.subr.mxu0 0.0
  %816 = vmatpush1.msra.mxu0 0.0
  %817 = vmatprep.subr.mxu0 0.0
  %818 = vmatpush1.msra.mxu0 0.0
  %819 = vmatprep.subr.mxu0 0.0
  %820 = vmatpush1.msra.mxu0 0.0
  %821 = vmatprep.subr.mxu0 0.0
  %822 = vmatpush1.msra.mxu0 0.0
  %823 = vmatprep.mubr.f32.mxu0 0.0
  %824 = vmatmul.mubr.f32.gmra.mrb[0].mxu0 %v757
  %v825 = vpop.f32.mrb[0].mxu0
  %v826 = vadd.f32 %v143, %v825
  %v827 = vpop.f32.mrb[0].mxu0
  %828 = vdwg.mxu0
  %v829 = vld [vmem:[%s9] sm:$0x1]
  %v830 = vlaneseq
  %v831 = vshrl.u32 %v830, 7
  %v832 = vsub.s32 0, %v831
  %v833 = vrot.slane %v829, %v832
  %v834 = vadd.f32 %v826, %v833
  %v835 = vld [vmem:[%s8] sm:$0xff]
  %v836 = vld [vmem:[%s8 + $0x8] sm:$0xff]
  %v837 = vld [vmem:[%s8 + $0x10] sm:$0xff]
  %v838 = vld [vmem:[%s8 + $0x18] sm:$0xff]
  %v839 = vld [vmem:[%s9 + $0x1] sm:$0x1]
  %v840 = vlaneseq
  %v841 = vshrl.u32 %v840, 7
  %v842 = vsub.s32 0, %v841
  %v843 = vrot.slane %v839, %v842
  %844 = vmatprep.subr.mxu0 0.0
  %845 = vmatpush1.msra.mxu0 %v835
  %846 = vmatprep.subr.mxu0 0.0
  %847 = vmatpush1.msra.mxu0 %v836
  %848 = vmatprep.subr.mxu0 0.0
  %849 = vmatpush1.msra.mxu0 %v837
  %850 = vmatprep.subr.mxu0 0.0
  %851 = vmatpush1.msra.mxu0 %v838
  %852 = vmatprep.subr.mxu0 0.0
  %853 = vmatpush1.msra.mxu0 0.0
  %854 = vmatprep.subr.mxu0 0.0
  %855 = vmatpush1.msra.mxu0 0.0
  %856 = vmatprep.subr.mxu0 0.0
  %857 = vmatpush1.msra.mxu0 0.0
  %858 = vmatprep.subr.mxu0 0.0
  %859 = vmatpush1.msra.mxu0 0.0
  %860 = vmatprep.subr.mxu0 0.0
  %861 = vmatpush1.msra.mxu0 0.0
  %862 = vmatprep.subr.mxu0 0.0
  %863 = vmatpush1.msra.mxu0 0.0
  %864 = vmatprep.subr.mxu0 0.0
  %865 = vmatpush1.msra.mxu0 0.0
  %866 = vmatprep.subr.mxu0 0.0
  %867 = vmatpush1.msra.mxu0 0.0
  %868 = vmatprep.subr.mxu0 0.0
  %869 = vmatpush1.msra.mxu0 0.0
  %870 = vmatprep.subr.mxu0 0.0
  %871 = vmatpush1.msra.mxu0 0.0
  %872 = vmatprep.subr.mxu0 0.0
  %873 = vmatpush1.msra.mxu0 0.0
  %874 = vmatprep.subr.mxu0 0.0
  %875 = vmatpush1.msra.mxu0 0.0
  %876 = vmatprep.subr.mxu0 0.0
  %877 = vmatpush1.msra.mxu0 0.0
  %878 = vmatprep.subr.mxu0 0.0
  %879 = vmatpush1.msra.mxu0 0.0
  %880 = vmatprep.subr.mxu0 0.0
  %881 = vmatpush1.msra.mxu0 0.0
  %882 = vmatprep.subr.mxu0 0.0
  %883 = vmatpush1.msra.mxu0 0.0
  %884 = vmatprep.subr.mxu0 0.0
  %885 = vmatpush1.msra.mxu0 0.0
  %886 = vmatprep.subr.mxu0 0.0
  %887 = vmatpush1.msra.mxu0 0.0
  %888 = vmatprep.subr.mxu0 0.0
  %889 = vmatpush1.msra.mxu0 0.0
  %890 = vmatprep.subr.mxu0 0.0
  %891 = vmatpush1.msra.mxu0 0.0
  %892 = vmatprep.subr.mxu0 0.0
  %893 = vmatpush1.msra.mxu0 0.0
  %894 = vmatprep.subr.mxu0 0.0
  %895 = vmatpush1.msra.mxu0 0.0
  %896 = vmatprep.subr.mxu0 0.0
  %897 = vmatpush1.msra.mxu0 0.0
  %898 = vmatprep.subr.mxu0 0.0
  %899 = vmatpush1.msra.mxu0 0.0
  %900 = vmatprep.subr.mxu0 0.0
  %901 = vmatpush1.msra.mxu0 0.0
  %902 = vmatprep.subr.mxu0 0.0
  %903 = vmatpush1.msra.mxu0 0.0
  %904 = vmatprep.subr.mxu0 0.0
  %905 = vmatpush1.msra.mxu0 0.0
  %906 = vmatprep.subr.mxu0 0.0
  %907 = vmatpush1.msra.mxu0 0.0
  %908 = vmatprep.mubr.f32.mxu0 0.0
  %909 = vmatmul.mubr.f32.gmra.mrb[0].mxu0 %v152
  %v910 = vpop.f32.mrb[0].mxu0
  %v911 = vadd.f32 %v843, %v910
  %v912 = vpop.f32.mrb[0].mxu0
  %913 = vdwg.mxu0
  %v914 = vadd.f32 %v834, %v911
  %v915 = vxor.u32 %v914, 2147483648
  %v916 = vmul.f32 %v915, 1.442695
  %v917 = vpow.pop %v916
  %v918 = vadd.f32 %v917, 1.0
  %v919 = vrcp.pop %v918
  %v920 = vmul.f32 1.0, %v919
  %922 = vrot.lane.b32.xlu0 %v911, 64
  %v923 = vpop.permute.xlu0 %922
  %v925 = vmul.f32 %v920, %v923
  %927 = vrot.lane.b32.xlu0 %v925, 64
  %v928 = vpop.permute.xlu0 %927
  %v930 = vadd.f32 %v834, %v928
  %v931 = vtanh.pop %v930
  %v932 = vsub.f32 1.0, %v920
  %934 = vrot.lane.b32.xlu0 %v931, 96
  %v935 = vpop.permute.xlu0 %934
  %v937 = vmul.f32 %v932, %v935
  %938 = vrot.lane.b32.xlu0 %v50, 32
  %v939 = vpop.permute.xlu0 %938
  %v941 = vmul.f32 %v920, %v939
  %v942 = vadd.f32 %v937, %v941
  %v943 = vld [vmem:[%s10] sm:$0xff]
  %v944 = vld [vmem:[%s10 + $0x8] sm:$0xff]
  %v945 = vld [vmem:[%s10 + $0x10] sm:$0xff]
  %v946 = vld [vmem:[%s10 + $0x18] sm:$0xff]
  %v947 = vld [vmem:[%s11] sm:$0x1]
  %v949 = vlaneseq
  %v950 = vshrl.u32 %v949, 7
  %v951 = vsub.s32 0, %v950
  %v952 = vrot.slane %v947, %v951
  %955 = vrot.lane.b32.xlu0 %v942, 96
  %v956 = vpop.permute.xlu0 %955
  %v957 = vsel %vm150, %v956, 0
  %959 = vmatprep.subr.mxu0 0.0
  %960 = vmatpush1.msra.mxu0 %v943
  %961 = vmatprep.subr.mxu0 0.0
  %962 = vmatpush1.msra.mxu0 %v944
  %963 = vmatprep.subr.mxu0 0.0
  %964 = vmatpush1.msra.mxu0 %v945
  %965 = vmatprep.subr.mxu0 0.0
  %966 = vmatpush1.msra.mxu0 %v946
  %967 = vmatprep.subr.mxu0 0.0
  %968 = vmatpush1.msra.mxu0 0.0
  %969 = vmatprep.subr.mxu0 0.0
  %970 = vmatpush1.msra.mxu0 0.0
  %971 = vmatprep.subr.mxu0 0.0
  %972 = vmatpush1.msra.mxu0 0.0
  %973 = vmatprep.subr.mxu0 0.0
  %974 = vmatpush1.msra.mxu0 0.0
  %975 = vmatprep.subr.mxu0 0.0
  %976 = vmatpush1.msra.mxu0 0.0
  %977 = vmatprep.subr.mxu0 0.0
  %978 = vmatpush1.msra.mxu0 0.0
  %979 = vmatprep.subr.mxu0 0.0
  %980 = vmatpush1.msra.mxu0 0.0
  %981 = vmatprep.subr.mxu0 0.0
  %982 = vmatpush1.msra.mxu0 0.0
  %983 = vmatprep.subr.mxu0 0.0
  %984 = vmatpush1.msra.mxu0 0.0
  %985 = vmatprep.subr.mxu0 0.0
  %986 = vmatpush1.msra.mxu0 0.0
  %987 = vmatprep.subr.mxu0 0.0
  %988 = vmatpush1.msra.mxu0 0.0
  %989 = vmatprep.subr.mxu0 0.0
  %990 = vmatpush1.msra.mxu0 0.0
  %991 = vmatprep.subr.mxu0 0.0
  %992 = vmatpush1.msra.mxu0 0.0
  %993 = vmatprep.subr.mxu0 0.0
  %994 = vmatpush1.msra.mxu0 0.0
  %995 = vmatprep.subr.mxu0 0.0
  %996 = vmatpush1.msra.mxu0 0.0
  %997 = vmatprep.subr.mxu0 0.0
  %998 = vmatpush1.msra.mxu0 0.0
  %999 = vmatprep.subr.mxu0 0.0
  %1000 = vmatpush1.msra.mxu0 0.0
  %1001 = vmatprep.subr.mxu0 0.0
  %1002 = vmatpush1.msra.mxu0 0.0
  %1003 = vmatprep.subr.mxu0 0.0
  %1004 = vmatpush1.msra.mxu0 0.0
  %1005 = vmatprep.subr.mxu0 0.0
  %1006 = vmatpush1.msra.mxu0 0.0
  %1007 = vmatprep.subr.mxu0 0.0
  %1008 = vmatpush1.msra.mxu0 0.0
  %1009 = vmatprep.subr.mxu0 0.0
  %1010 = vmatpush1.msra.mxu0 0.0
  %1011 = vmatprep.subr.mxu0 0.0
  %1012 = vmatpush1.msra.mxu0 0.0
  %1013 = vmatprep.subr.mxu0 0.0
  %1014 = vmatpush1.msra.mxu0 0.0
  %1015 = vmatprep.subr.mxu0 0.0
  %1016 = vmatpush1.msra.mxu0 0.0
  %1017 = vmatprep.subr.mxu0 0.0
  %1018 = vmatpush1.msra.mxu0 0.0
  %1019 = vmatprep.subr.mxu0 0.0
  %1020 = vmatpush1.msra.mxu0 0.0
  %1021 = vmatprep.subr.mxu0 0.0
  %1022 = vmatpush1.msra.mxu0 0.0
  %1023 = vmatprep.mubr.f32.mxu0 0.0
  %1024 = vmatmul.mubr.f32.gmra.mrb[0].mxu0 %v957
  %v1025 = vpop.f32.mrb[0].mxu0
  %v1026 = vadd.f32 %v952, %v1025
  %v1027 = vpop.f32.mrb[0].mxu0
  %1028 = vdwg.mxu0
  %vm1029 = vcmp.gt.f32.partialorder %v1026, 0.0
  %v1030 = vmul.f32 %v1026, 0.01
  %v1031 = vsel %vm1029, %v1026, %v1030
  %v1032 = vld [vmem:[%s12] sm:$0xff]
  %v1033 = vld [vmem:[%s12 + $0x8] sm:$0xff]
  %v1034 = vld [vmem:[%s12 + $0x10] sm:$0xff]
  %v1035 = vld [vmem:[%s12 + $0x18] sm:$0xff]
  %v1036 = vld [vmem:[%s13] sm:$0x1]
  %v1038 = vlaneseq
  %v1039 = vshrl.u32 %v1038, 7
  %v1040 = vsub.s32 0, %v1039
  %v1041 = vrot.slane %v1036, %v1040
  %v1044 = vsel %vm150, %v1031, 0
  %1046 = vmatprep.subr.mxu0 0.0
  %1047 = vmatpush1.msra.mxu0 %v1032
  %1048 = vmatprep.subr.mxu0 0.0
  %1049 = vmatpush1.msra.mxu0 %v1033
  %1050 = vmatprep.subr.mxu0 0.0
  %1051 = vmatpush1.msra.mxu0 %v1034
  %1052 = vmatprep.subr.mxu0 0.0
  %1053 = vmatpush1.msra.mxu0 %v1035
  %1054 = vmatprep.subr.mxu0 0.0
  %1055 = vmatpush1.msra.mxu0 0.0
  %1056 = vmatprep.subr.mxu0 0.0
  %1057 = vmatpush1.msra.mxu0 0.0
  %1058 = vmatprep.subr.mxu0 0.0
  %1059 = vmatpush1.msra.mxu0 0.0
  %1060 = vmatprep.subr.mxu0 0.0
  %1061 = vmatpush1.msra.mxu0 0.0
  %1062 = vmatprep.subr.mxu0 0.0
  %1063 = vmatpush1.msra.mxu0 0.0
  %1064 = vmatprep.subr.mxu0 0.0
  %1065 = vmatpush1.msra.mxu0 0.0
  %1066 = vmatprep.subr.mxu0 0.0
  %1067 = vmatpush1.msra.mxu0 0.0
  %1068 = vmatprep.subr.mxu0 0.0
  %1069 = vmatpush1.msra.mxu0 0.0
  %1070 = vmatprep.subr.mxu0 0.0
  %1071 = vmatpush1.msra.mxu0 0.0
  %1072 = vmatprep.subr.mxu0 0.0
  %1073 = vmatpush1.msra.mxu0 0.0
  %1074 = vmatprep.subr.mxu0 0.0
  %1075 = vmatpush1.msra.mxu0 0.0
  %1076 = vmatprep.subr.mxu0 0.0
  %1077 = vmatpush1.msra.mxu0 0.0
  %1078 = vmatprep.subr.mxu0 0.0
  %1079 = vmatpush1.msra.mxu0 0.0
  %1080 = vmatprep.subr.mxu0 0.0
  %1081 = vmatpush1.msra.mxu0 0.0
  %1082 = vmatprep.subr.mxu0 0.0
  %1083 = vmatpush1.msra.mxu0 0.0
  %1084 = vmatprep.subr.mxu0 0.0
  %1085 = vmatpush1.msra.mxu0 0.0
  %1086 = vmatprep.subr.mxu0 0.0
  %1087 = vmatpush1.msra.mxu0 0.0
  %1088 = vmatprep.subr.mxu0 0.0
  %1089 = vmatpush1.msra.mxu0 0.0
  %1090 = vmatprep.subr.mxu0 0.0
  %1091 = vmatpush1.msra.mxu0 0.0
  %1092 = vmatprep.subr.mxu0 0.0
  %1093 = vmatpush1.msra.mxu0 0.0
  %1094 = vmatprep.subr.mxu0 0.0
  %1095 = vmatpush1.msra.mxu0 0.0
  %1096 = vmatprep.subr.mxu0 0.0
  %1097 = vmatpush1.msra.mxu0 0.0
  %1098 = vmatprep.subr.mxu0 0.0
  %1099 = vmatpush1.msra.mxu0 0.0
  %1100 = vmatprep.subr.mxu0 0.0
  %1101 = vmatpush1.msra.mxu0 0.0
  %1102 = vmatprep.subr.mxu0 0.0
  %1103 = vmatpush1.msra.mxu0 0.0
  %1104 = vmatprep.subr.mxu0 0.0
  %1105 = vmatpush1.msra.mxu0 0.0
  %1106 = vmatprep.subr.mxu0 0.0
  %1107 = vmatpush1.msra.mxu0 0.0
  %1108 = vmatprep.subr.mxu0 0.0
  %1109 = vmatpush1.msra.mxu0 0.0
  %1110 = vmatprep.mubr.f32.mxu0 0.0
  %1111 = vmatmul.mubr.f32.gmra.mrb[0].mxu0 %v1044
  %v1112 = vpop.f32.mrb[0].mxu0
  %v1113 = vadd.f32 %v1041, %v1112
  %v1114 = vpop.f32.mrb[0].mxu0
  %1115 = vdwg.mxu0
  %1116 = vst [vmem:[%s14] sm:$0xff] %v1113
  %1118 = vst.msk [vmem:[%s15] sm:$0xff] %vm150, %v956
  %v1119 = vlaneseq
  %v1120 = vshrl.u32 %v1119, 7
  %v1121 = vsub.s32 %v53, %v1120
  %v1122 = vrot.slane %v637, %v1121
  %v1123 = vlaneseq
  %v1124 = vshrl.u32 %v1123, 7
  %v1125 = vsub.s32 %v53, %v1124
  %v1126 = vrot.slane %v642, %v1125
  %v1127 = vlaneseq
  %v1128 = vshrl.u32 %v1127, 7
  %v1129 = vsub.s32 %v53, %v1128
  %v1130 = vrot.slane %v647, %v1129
  %v1131 = vlaneseq
  %v1132 = vshrl.u32 %v1131, 7
  %v1133 = vsub.s32 %v53, %v1132
  %v1134 = vrot.slane %v652, %v1133
  %v1135 = vlaneseq
  %v1136 = vshrl.u32 %v1135, 7
  %v1137 = vsub.s32 %v53, %v1136
  %v1138 = vrot.slane %v657, %v1137
  %v1139 = vlaneseq
  %v1140 = vshrl.u32 %v1139, 7
  %v1141 = vsub.s32 %v53, %v1140
  %v1142 = vrot.slane %v662, %v1141
  %v1143 = vlaneseq
  %v1144 = vshrl.u32 %v1143, 7
  %v1145 = vsub.s32 %v53, %v1144
  %v1146 = vrot.slane %v667, %v1145
  %v1147 = vlaneseq
  %v1148 = vshrl.u32 %v1147, 7
  %v1149 = vsub.s32 %v53, %v1148
  %v1150 = vrot.slane %v672, %v1149
  %v1151 = vsel %vm417, %v1126, %v1122
  %v1152 = vsel %vm419, %v1130, %v1151
  %v1153 = vsel %vm421, %v1134, %v1152
  %v1154 = vsel %vm423, %v1138, %v1153
  %v1155 = vsel %vm425, %v1142, %v1154
  %v1156 = vsel %vm427, %v1146, %v1155
  %v1157 = vsel %vm429, %v1150, %v1156
  %1159 = vst.msk [vmem:[%s16] sm:$0xff] %vm432, %v1157
  // Predicated region
  $region58: #{decoder_forward.1} parent=0 // pred_check
    _
  $region59: #{decoder_forward.1} parent=0 // pred_check_branch
    %1161 = sbr.rel (0) target = $region61
  $region60: #{decoder_forward.1} parent=0 // pred_region
    _
  $region61: #{decoder_forward.1} parent=0 // pred_fallthru
    _
  // Predicated region
  $region62: #{decoder_forward.1} parent=0 // pred_check
    _
  $region63: #{decoder_forward.1} parent=0 // pred_check_branch
    %1163 = sbr.rel (0) target = $region65
  $region64: #{decoder_forward.1} parent=0 // pred_region
    _
  $region65: #{decoder_forward.1} parent=0 // pred_fallthru
    _
  // Predicated region
  $region66: #{decoder_forward.1} parent=0 // pred_check
    _
  $region67: #{decoder_forward.1} parent=0 // pred_check_branch
    %1165 = sbr.rel (0) target = $region69
  $region68: #{decoder_forward.1} parent=0 // pred_region
    _
  $region69: #{decoder_forward.1} parent=0 // pred_fallthru
    _
  // Predicated region
  $region70: #{decoder_forward.1} parent=0 // pred_check
    _
  $region71: #{decoder_forward.1} parent=0 // pred_check_branch
    %1167 = sbr.rel (0) target = $region73
  $region72: #{decoder_forward.1} parent=0 // pred_region
    _
  $region73: #{decoder_forward.1} parent=0 // pred_fallthru
    _
  // Predicated region
  $region74: #{decoder_forward.1} parent=0 // pred_check
    _
  $region75: #{decoder_forward.1} parent=0 // pred_check_branch
    %1169 = sbr.rel (0) target = $region77
  $region76: #{decoder_forward.1} parent=0 // pred_region
    _
  $region77: #{decoder_forward.1} parent=0 // pred_fallthru
    _
  // Predicated region
  $region78: #{decoder_forward.1} parent=0 // pred_check
    _
  $region79: #{decoder_forward.1} parent=0 // pred_check_branch
    %1171 = sbr.rel (0) target = $region81
  $region80: #{decoder_forward.1} parent=0 // pred_region
    _
  $region81: #{decoder_forward.1} parent=0 // pred_fallthru
    _

</llo_original>
